<compile_context>
chip_gen: v6e
topology: v6e:2x2x1
jax: 0.10.0
libtpu: 0.0.40
codegen_flags: <defaults>
</compile_context>

<pallas_src>
import math

import jax
import jax.numpy as jnp
from jax.experimental import pallas as pl
from jax.experimental.pallas import tpu as pltpu

BN_EPS = 1e-5  # PyTorch BatchNorm1d default eps


# ---------------------------------------------------------------------------
# Fused Pallas kernel: full ResNet1D forward for one sample (batch = grid axis)
# ---------------------------------------------------------------------------
def _make_fused_kernel(block_descs, L):
    """block_descs: tuple of bools, has_downsample per residual block (in order).

    Weight-ref layout (all 2D, BN already folded into conv weights/bias):
      [stem_w, stem_b,
       for each block: w1, b1, w2, b2, (wd, bd if has_downsample),
       final_w, final_b]
    conv3 weights are pre-concatenated taps (Cout, 3*Cin), ordered
    [tap l-1 | tap l | tap l+1] to match the in-kernel activation concat.
    """

    def kernel(x_ref, *refs):
        w = refs[:-1]
        o_ref = refs[-1]

        # Hoisted lane masks reproducing zero padding (pad=1) at both ends.
        lane = jax.lax.broadcasted_iota(jnp.int32, (1, L), 1)
        m_left = lane >= 1        # positions where x[l-1] is in range
        m_right = lane <= L - 2   # positions where x[l+1] is in range

        def conv3(a, wi, bi):
            # a: (Cin, L) f32.  Single MXU matmul over the 3 concatenated taps.
            a_m1 = jnp.where(m_left, pltpu.roll(a, shift=1, axis=1), 0.0)
            a_p1 = jnp.where(m_right, pltpu.roll(a, shift=L - 1, axis=1), 0.0)
            acat = jnp.concatenate([a_m1, a, a_p1], axis=0)       # (3*Cin, L)
            y = jnp.dot(w[wi][...], acat, preferred_element_type=jnp.float32)
            return y + w[bi][...]

        h = x_ref[...].astype(jnp.float32)                         # (Cin, L)

        # stem: relu1(bn1(conv1(x)))
        h = jnp.maximum(conv3(h, 0, 1), 0.0)

        idx = 2
        for has_down in block_descs:
            t = jnp.maximum(conv3(h, idx, idx + 1), 0.0)           # conv1+bn1+relu
            t = conv3(t, idx + 2, idx + 3)                         # conv2+bn2
            idx += 4
            if has_down:                                           # 1x1 conv + bn shortcut
                ident = (jnp.dot(w[idx][...], h,
                                 preferred_element_type=jnp.float32)
                         + w[idx + 1][...])
                idx += 2
            else:
                ident = h
            h = jnp.maximum(t + ident, 0.0)                        # residual add + relu

        # head: relu2(bn2(conv2(h)))
        h = jnp.maximum(conv3(h, idx, idx + 1), 0.0)
        o_ref[...] = h.astype(o_ref.dtype)

    return kernel


# ---------------------------------------------------------------------------
# BN folding + parameter flattening (pure JAX, outside the kernel)
# ---------------------------------------------------------------------------
def _fold_bn(bn):
    gamma, beta, mean, var = bn
    scale = gamma / jnp.sqrt(var + BN_EPS)
    shift = beta - mean * scale
    return scale, shift


def _fold_conv3_bn(w, bn):
    # w: (Cout, Cin, 3), bias-free conv followed by eval-mode BN.
    scale, shift = _fold_bn(bn)
    wcat = jnp.transpose(w, (0, 2, 1)).reshape(w.shape[0], -1)  # [tap0|tap1|tap2]
    return (scale[:, None] * wcat).astype(jnp.float32), shift[:, None].astype(jnp.float32)


def _fold_conv1_bn(w, bn):
    # w: (Cout, Cin, 1) 1x1 downsample conv + BN.
    scale, shift = _fold_bn(bn)
    return (scale[:, None] * w[:, :, 0]).astype(jnp.float32), shift[:, None].astype(jnp.float32)


def _fold_params(params):
    flat = list(_fold_conv3_bn(params["stem"]["w"], params["stem"]["bn"]))
    descs = []
    for blk in params["blocks"]:
        flat += list(_fold_conv3_bn(blk["w1"], blk["bn1"]))
        flat += list(_fold_conv3_bn(blk["w2"], blk["bn2"]))
        has_down = "wd" in blk
        if has_down:
            flat += list(_fold_conv1_bn(blk["wd"], blk["bnd"]))
        descs.append(has_down)
    flat += list(_fold_conv3_bn(params["final"]["w"], params["final"]["bn"]))
    out_ch = params["final"]["w"].shape[0]
    return flat, tuple(descs), out_ch


# ---------------------------------------------------------------------------
# pallas_call wrapper
# ---------------------------------------------------------------------------
def resnet1d_forward(x, params):
    B, in_ch, L = x.shape
    flat, block_descs, out_ch = _fold_params(params)
    kern = _make_fused_kernel(block_descs, L)

    w_specs = [pl.BlockSpec(wi.shape, lambda b: (0, 0)) for wi in flat]
    return pl.pallas_call(
        kern,
        out_shape=jax.ShapeDtypeStruct((B, out_ch, L), x.dtype),
        grid=(B,),
        in_specs=[pl.BlockSpec((pl.Squeezed(), in_ch, L), lambda b: (b, 0, 0))] + w_specs,
        out_specs=pl.BlockSpec((pl.Squeezed(), out_ch, L), lambda b: (b, 0, 0)),
        compiler_params=pltpu.CompilerParams(
            dimension_semantics=("parallel",),
            vmem_limit_bytes=32 * 1024 * 1024,
        ),
    )(x, *flat)


# ---------------------------------------------------------------------------
# Synthetic parameters (PyTorch-style init) and a pure-JAX reference
# ---------------------------------------------------------------------------
def _kaiming_conv(key, cout, cin, k):
    # kaiming_normal_(mode='fan_out', nonlinearity='relu'): std = sqrt(2 / (cout*k))
    std = math.sqrt(2.0 / (cout * k))
    return std * jax.random.normal(key, (cout, cin, k), jnp.float32)


def _make_bn(key, c):
    # Synthetic eval-mode BN statistics (exercise the BN fold; see TODO above).
    k1, k2, k3, k4 = jax.random.split(key, 4)
    gamma = jax.random.uniform(k1, (c,), jnp.float32, 0.8, 1.2)
    beta = jax.random.uniform(k2, (c,), jnp.float32, -0.1, 0.1)
    mean = 0.1 * jax.random.normal(k3, (c,), jnp.float32)
    var = jax.random.uniform(k4, (c,), jnp.float32, 0.5, 1.5)
    return gamma, beta, mean, var


def _make_block(key, cin, cout, stride=1):
    ks = jax.random.split(key, 6)
    blk = dict(
        w1=_kaiming_conv(ks[0], cout, cin, 3), bn1=_make_bn(ks[1], cout),
        w2=_kaiming_conv(ks[2], cout, cout, 3), bn2=_make_bn(ks[3], cout),
    )
    if stride != 1 or cin != cout:
        blk["wd"] = _kaiming_conv(ks[4], cout, cin, 1)
        blk["bnd"] = _make_bn(ks[5], cout)
    return blk


def make_params(key, in_ch, out_ch, hidden, num_blocks):
    keys = jax.random.split(key, 4 + sum(num_blocks))
    params = dict(
        stem=dict(w=_kaiming_conv(keys[0], hidden, in_ch, 3), bn=_make_bn(keys[1], hidden)),
        blocks=[],
    )
    ki = 2
    cin = hidden
    for li, nb in enumerate(num_blocks):
        cout = hidden * (2 ** (li + 1))
        params["blocks"].append(_make_block(keys[ki], cin, cout)); ki += 1
        for _ in range(1, nb):
            params["blocks"].append(_make_block(keys[ki], cout, cout)); ki += 1
        cin = cout
    params["final"] = dict(w=_kaiming_conv(keys[ki], out_ch, cin, 3),
                           bn=_make_bn(keys[ki + 1], out_ch))
    return params


def _conv1d(x, w, pad):
    return jax.lax.conv_general_dilated(
        x, w, window_strides=(1,), padding=[(pad, pad)],
        dimension_numbers=("NCH", "OIH", "NCH"))


def _bn_eval(x, bn):
    gamma, beta, mean, var = bn
    inv = gamma / jnp.sqrt(var + BN_EPS)
    return (x - mean[None, :, None]) * inv[None, :, None] + beta[None, :, None]


def resnet1d_reference(x, params):
    h = jax.nn.relu(_bn_eval(_conv1d(x, params["stem"]["w"], 1), params["stem"]["bn"]))
    for blk in params["blocks"]:
        t = jax.nn.relu(_bn_eval(_conv1d(h, blk["w1"], 1), blk["bn1"]))
        t = _bn_eval(_conv1d(t, blk["w2"], 1), blk["bn2"])
        ident = h
        if "wd" in blk:
            ident = _bn_eval(_conv1d(h, blk["wd"], 0), blk["bnd"])
        h = jax.nn.relu(t + ident)
    h = jax.nn.relu(_bn_eval(_conv1d(h, params["final"]["w"], 1), params["final"]["bn"]))
    return h


if __name__ == "__main__":
    key = jax.random.PRNGKey(0)
    kp, kx = jax.random.split(key)

    # ResNet1D(in_channels=8, out_channels=8, hidden_channels=8, num_blocks=[2, 2])
    B, in_ch, out_ch, hidden, L = 2, 8, 8, 8, 128
    num_blocks = (2, 2)
    params = make_params(kp, in_ch, out_ch, hidden, num_blocks)
    x = jax.random.normal(kx, (B, in_ch, L), jnp.float32)

    out = jax.jit(resnet1d_forward)(x, params)
    jax.block_until_ready(out)
    assert out.shape == (B, out_ch, L), out.shape

    # Sanity-check against a pure-JAX (lax.conv) eval-mode reference.
    ref = resnet1d_reference(x, params)
    err = float(jnp.max(jnp.abs(out - ref)))
    assert err < 5e-2, f"max abs error vs reference: {err}"

    print("KERNEL_OK")
</pallas_src>

<mosaic_0001>
module attributes {stable_mosaic.version = 11 : i64} {
  func.func @kernel(%arg0: i32, %arg1: memref<1x8x128xf32, #tpu.memory_space<vmem>>, %arg2: memref<8x24xf32, #tpu.memory_space<vmem>>, %arg3: memref<8x1xf32, #tpu.memory_space<vmem>>, %arg4: memref<16x24xf32, #tpu.memory_space<vmem>>, %arg5: memref<16x1xf32, #tpu.memory_space<vmem>>, %arg6: memref<16x48xf32, #tpu.memory_space<vmem>>, %arg7: memref<16x1xf32, #tpu.memory_space<vmem>>, %arg8: memref<16x8xf32, #tpu.memory_space<vmem>>, %arg9: memref<16x1xf32, #tpu.memory_space<vmem>>, %arg10: memref<16x48xf32, #tpu.memory_space<vmem>>, %arg11: memref<16x1xf32, #tpu.memory_space<vmem>>, %arg12: memref<16x48xf32, #tpu.memory_space<vmem>>, %arg13: memref<16x1xf32, #tpu.memory_space<vmem>>, %arg14: memref<32x48xf32, #tpu.memory_space<vmem>>, %arg15: memref<32x1xf32, #tpu.memory_space<vmem>>, %arg16: memref<32x96xf32, #tpu.memory_space<vmem>>, %arg17: memref<32x1xf32, #tpu.memory_space<vmem>>, %arg18: memref<32x16xf32, #tpu.memory_space<vmem>>, %arg19: memref<32x1xf32, #tpu.memory_space<vmem>>, %arg20: memref<32x96xf32, #tpu.memory_space<vmem>>, %arg21: memref<32x1xf32, #tpu.memory_space<vmem>>, %arg22: memref<32x96xf32, #tpu.memory_space<vmem>>, %arg23: memref<32x1xf32, #tpu.memory_space<vmem>>, %arg24: memref<8x96xf32, #tpu.memory_space<vmem>>, %arg25: memref<8x1xf32, #tpu.memory_space<vmem>>, %arg26: memref<1x8x128xf32, #tpu.memory_space<vmem>>) attributes {dimension_semantics = [#tpu.dimension_semantics<parallel>], iteration_bounds = array<i64: 2>, scalar_prefetch = 0 : i64, scratch_operands = 0 : i64, tpu.core_type = #tpu.core_type<tc>, window_params = [{transform_indices = @transform_0, window_bounds = array<i64: 1, 8, 128>}, {pipeline_mode = #tpu.pipeline_mode<synchronous>, transform_indices = @transform_1, window_bounds = array<i64: 8, 24>}, {pipeline_mode = #tpu.pipeline_mode<synchronous>, transform_indices = @transform_2, window_bounds = array<i64: 8, 1>}, {pipeline_mode = #tpu.pipeline_mode<synchronous>, transform_indices = @transform_3, window_bounds = array<i64: 16, 24>}, {pipeline_mode = #tpu.pipeline_mode<synchronous>, transform_indices = @transform_4, window_bounds = array<i64: 16, 1>}, {pipeline_mode = #tpu.pipeline_mode<synchronous>, transform_indices = @transform_5, window_bounds = array<i64: 16, 48>}, {pipeline_mode = #tpu.pipeline_mode<synchronous>, transform_indices = @transform_6, window_bounds = array<i64: 16, 1>}, {pipeline_mode = #tpu.pipeline_mode<synchronous>, transform_indices = @transform_7, window_bounds = array<i64: 16, 8>}, {pipeline_mode = #tpu.pipeline_mode<synchronous>, transform_indices = @transform_8, window_bounds = array<i64: 16, 1>}, {pipeline_mode = #tpu.pipeline_mode<synchronous>, transform_indices = @transform_9, window_bounds = array<i64: 16, 48>}, {pipeline_mode = #tpu.pipeline_mode<synchronous>, transform_indices = @transform_10, window_bounds = array<i64: 16, 1>}, {pipeline_mode = #tpu.pipeline_mode<synchronous>, transform_indices = @transform_11, window_bounds = array<i64: 16, 48>}, {pipeline_mode = #tpu.pipeline_mode<synchronous>, transform_indices = @transform_12, window_bounds = array<i64: 16, 1>}, {pipeline_mode = #tpu.pipeline_mode<synchronous>, transform_indices = @transform_13, window_bounds = array<i64: 32, 48>}, {pipeline_mode = #tpu.pipeline_mode<synchronous>, transform_indices = @transform_14, window_bounds = array<i64: 32, 1>}, {pipeline_mode = #tpu.pipeline_mode<synchronous>, transform_indices = @transform_15, window_bounds = array<i64: 32, 96>}, {pipeline_mode = #tpu.pipeline_mode<synchronous>, transform_indices = @transform_16, window_bounds = array<i64: 32, 1>}, {pipeline_mode = #tpu.pipeline_mode<synchronous>, transform_indices = @transform_17, window_bounds = array<i64: 32, 16>}, {pipeline_mode = #tpu.pipeline_mode<synchronous>, transform_indices = @transform_18, window_bounds = array<i64: 32, 1>}, {pipeline_mode = #tpu.pipeline_mode<synchronous>, transform_indices = @transform_19, window_bounds = array<i64: 32, 96>}, {pipeline_mode = #tpu.pipeline_mode<synchronous>, transform_indices = @transform_20, window_bounds = array<i64: 32, 1>}, {pipeline_mode = #tpu.pipeline_mode<synchronous>, transform_indices = @transform_21, window_bounds = array<i64: 32, 96>}, {pipeline_mode = #tpu.pipeline_mode<synchronous>, transform_indices = @transform_22, window_bounds = array<i64: 32, 1>}, {pipeline_mode = #tpu.pipeline_mode<synchronous>, transform_indices = @transform_23, window_bounds = array<i64: 8, 96>}, {pipeline_mode = #tpu.pipeline_mode<synchronous>, transform_indices = @transform_24, window_bounds = array<i64: 8, 1>}, {transform_indices = @transform_25, window_bounds = array<i64: 1, 8, 128>}]} {
    %0 = tpu.iota {dimensions = array<i32: 1>} : vector<1x128xi32>
    %c1_i32 = arith.constant 1 : i32
    %1 = vector.broadcast %c1_i32 : i32 to vector<1x128xi32>
    %2 = arith.cmpi sge, %0, %1 : vector<1x128xi32>
    %c126_i32 = arith.constant 126 : i32
    %3 = vector.broadcast %c126_i32 : i32 to vector<1x128xi32>
    %4 = arith.cmpi sle, %0, %3 : vector<1x128xi32>
    %c0 = arith.constant 0 : index
    %c0_0 = arith.constant 0 : index
    %c0_1 = arith.constant 0 : index
    %5 = vector.load %arg1[%c0, %c0_0, %c0_1] : memref<1x8x128xf32, #tpu.memory_space<vmem>>, vector<1x8x128xf32>
    %6 = vector.shape_cast %5 : vector<1x8x128xf32> to vector<8x128xf32>
    %c1_i32_2 = arith.constant 1 : i32
    %7 = tpu.dynamic_rotate %6 by %c1_i32_2 dim 1 : vector<8x128xf32>, i32 -> vector<8x128xf32>
    %cst = arith.constant 0.000000e+00 : f32
    %8 = vector.shape_cast %2 : vector<1x128xi1> to vector<1x128xi1>
    %9 = vector.broadcast %8 : vector<1x128xi1> to vector<8x128xi1>
    %10 = vector.broadcast %cst : f32 to vector<8x128xf32>
    %11 = arith.select %9, %7, %10 : vector<8x128xi1>, vector<8x128xf32>
    %c127_i32 = arith.constant 127 : i32
    %12 = tpu.dynamic_rotate %6 by %c127_i32 dim 1 : vector<8x128xf32>, i32 -> vector<8x128xf32>
    %cst_3 = arith.constant 0.000000e+00 : f32
    %13 = vector.shape_cast %4 : vector<1x128xi1> to vector<1x128xi1>
    %14 = vector.broadcast %13 : vector<1x128xi1> to vector<8x128xi1>
    %15 = vector.broadcast %cst_3 : f32 to vector<8x128xf32>
    %16 = arith.select %14, %12, %15 : vector<8x128xi1>, vector<8x128xf32>
    %17 = tpu.concatenate %11, %6, %16 in 0 : vector<8x128xf32>, vector<8x128xf32>, vector<8x128xf32> -> vector<24x128xf32>
    %c0_4 = arith.constant 0 : index
    %c0_5 = arith.constant 0 : index
    %18 = vector.load %arg2[%c0_4, %c0_5] : memref<8x24xf32, #tpu.memory_space<vmem>>, vector<8x24xf32>
    %cst_6 = arith.constant dense<0.000000e+00> : vector<8x128xf32>
    %19 = tpu.matmul %18, %17, %cst_6 {dimension_numbers = #tpu.dot_dimension_numbers<[1], [0], [0], [1], [0, 0, 1, 1], [], []>} : vector<8x24xf32>, vector<24x128xf32>, vector<8x128xf32> -> vector<8x128xf32>
    %c0_7 = arith.constant 0 : index
    %c0_8 = arith.constant 0 : index
    %20 = vector.load %arg3[%c0_7, %c0_8] : memref<8x1xf32, #tpu.memory_space<vmem>>, vector<8x1xf32>
    %21 = vector.broadcast %20 : vector<8x1xf32> to vector<8x128xf32>
    %22 = arith.addf %19, %21 : vector<8x128xf32>
    %cst_9 = arith.constant 0.000000e+00 : f32
    %23 = vector.broadcast %cst_9 : f32 to vector<8x128xf32>
    %24 = arith.maximumf %22, %23 : vector<8x128xf32>
    %c1_i32_10 = arith.constant 1 : i32
    %25 = tpu.dynamic_rotate %24 by %c1_i32_10 dim 1 : vector<8x128xf32>, i32 -> vector<8x128xf32>
    %cst_11 = arith.constant 0.000000e+00 : f32
    %26 = vector.shape_cast %2 : vector<1x128xi1> to vector<1x128xi1>
    %27 = vector.broadcast %26 : vector<1x128xi1> to vector<8x128xi1>
    %28 = vector.broadcast %cst_11 : f32 to vector<8x128xf32>
    %29 = arith.select %27, %25, %28 : vector<8x128xi1>, vector<8x128xf32>
    %c127_i32_12 = arith.constant 127 : i32
    %30 = tpu.dynamic_rotate %24 by %c127_i32_12 dim 1 : vector<8x128xf32>, i32 -> vector<8x128xf32>
    %cst_13 = arith.constant 0.000000e+00 : f32
    %31 = vector.shape_cast %4 : vector<1x128xi1> to vector<1x128xi1>
    %32 = vector.broadcast %31 : vector<1x128xi1> to vector<8x128xi1>
    %33 = vector.broadcast %cst_13 : f32 to vector<8x128xf32>
    %34 = arith.select %32, %30, %33 : vector<8x128xi1>, vector<8x128xf32>
    %35 = tpu.concatenate %29, %24, %34 in 0 : vector<8x128xf32>, vector<8x128xf32>, vector<8x128xf32> -> vector<24x128xf32>
    %c0_14 = arith.constant 0 : index
    %c0_15 = arith.constant 0 : index
    %36 = vector.load %arg4[%c0_14, %c0_15] : memref<16x24xf32, #tpu.memory_space<vmem>>, vector<16x24xf32>
    %cst_16 = arith.constant dense<0.000000e+00> : vector<16x128xf32>
    %37 = tpu.matmul %36, %35, %cst_16 {dimension_numbers = #tpu.dot_dimension_numbers<[1], [0], [0], [1], [0, 0, 1, 1], [], []>} : vector<16x24xf32>, vector<24x128xf32>, vector<16x128xf32> -> vector<16x128xf32>
    %c0_17 = arith.constant 0 : index
    %c0_18 = arith.constant 0 : index
    %38 = vector.load %arg5[%c0_17, %c0_18] : memref<16x1xf32, #tpu.memory_space<vmem>>, vector<16x1xf32>
    %39 = vector.broadcast %38 : vector<16x1xf32> to vector<16x128xf32>
    %40 = arith.addf %37, %39 : vector<16x128xf32>
    %cst_19 = arith.constant 0.000000e+00 : f32
    %41 = vector.broadcast %cst_19 : f32 to vector<16x128xf32>
    %42 = arith.maximumf %40, %41 : vector<16x128xf32>
    %c1_i32_20 = arith.constant 1 : i32
    %43 = tpu.dynamic_rotate %42 by %c1_i32_20 dim 1 : vector<16x128xf32>, i32 -> vector<16x128xf32>
    %cst_21 = arith.constant 0.000000e+00 : f32
    %44 = vector.shape_cast %2 : vector<1x128xi1> to vector<1x128xi1>
    %45 = vector.broadcast %44 : vector<1x128xi1> to vector<16x128xi1>
    %46 = vector.broadcast %cst_21 : f32 to vector<16x128xf32>
    %47 = arith.select %45, %43, %46 : vector<16x128xi1>, vector<16x128xf32>
    %c127_i32_22 = arith.constant 127 : i32
    %48 = tpu.dynamic_rotate %42 by %c127_i32_22 dim 1 : vector<16x128xf32>, i32 -> vector<16x128xf32>
    %cst_23 = arith.constant 0.000000e+00 : f32
    %49 = vector.shape_cast %4 : vector<1x128xi1> to vector<1x128xi1>
    %50 = vector.broadcast %49 : vector<1x128xi1> to vector<16x128xi1>
    %51 = vector.broadcast %cst_23 : f32 to vector<16x128xf32>
    %52 = arith.select %50, %48, %51 : vector<16x128xi1>, vector<16x128xf32>
    %53 = tpu.concatenate %47, %42, %52 in 0 : vector<16x128xf32>, vector<16x128xf32>, vector<16x128xf32> -> vector<48x128xf32>
    %c0_24 = arith.constant 0 : index
    %c0_25 = arith.constant 0 : index
    %54 = vector.load %arg6[%c0_24, %c0_25] : memref<16x48xf32, #tpu.memory_space<vmem>>, vector<16x48xf32>
    %cst_26 = arith.constant dense<0.000000e+00> : vector<16x128xf32>
    %55 = tpu.matmul %54, %53, %cst_26 {dimension_numbers = #tpu.dot_dimension_numbers<[1], [0], [0], [1], [0, 0, 1, 1], [], []>} : vector<16x48xf32>, vector<48x128xf32>, vector<16x128xf32> -> vector<16x128xf32>
    %c0_27 = arith.constant 0 : index
    %c0_28 = arith.constant 0 : index
    %56 = vector.load %arg7[%c0_27, %c0_28] : memref<16x1xf32, #tpu.memory_space<vmem>>, vector<16x1xf32>
    %57 = vector.broadcast %56 : vector<16x1xf32> to vector<16x128xf32>
    %58 = arith.addf %55, %57 : vector<16x128xf32>
    %c0_29 = arith.constant 0 : index
    %c0_30 = arith.constant 0 : index
    %59 = vector.load %arg8[%c0_29, %c0_30] : memref<16x8xf32, #tpu.memory_space<vmem>>, vector<16x8xf32>
    %cst_31 = arith.constant dense<0.000000e+00> : vector<16x128xf32>
    %60 = tpu.matmul %59, %24, %cst_31 {dimension_numbers = #tpu.dot_dimension_numbers<[1], [0], [0], [1], [0, 0, 1, 1], [], []>} : vector<16x8xf32>, vector<8x128xf32>, vector<16x128xf32> -> vector<16x128xf32>
    %c0_32 = arith.constant 0 : index
    %c0_33 = arith.constant 0 : index
    %61 = vector.load %arg9[%c0_32, %c0_33] : memref<16x1xf32, #tpu.memory_space<vmem>>, vector<16x1xf32>
    %62 = vector.broadcast %61 : vector<16x1xf32> to vector<16x128xf32>
    %63 = arith.addf %60, %62 : vector<16x128xf32>
    %64 = arith.addf %58, %63 : vector<16x128xf32>
    %cst_34 = arith.constant 0.000000e+00 : f32
    %65 = vector.broadcast %cst_34 : f32 to vector<16x128xf32>
    %66 = arith.maximumf %64, %65 : vector<16x128xf32>
    %c1_i32_35 = arith.constant 1 : i32
    %67 = tpu.dynamic_rotate %66 by %c1_i32_35 dim 1 : vector<16x128xf32>, i32 -> vector<16x128xf32>
    %cst_36 = arith.constant 0.000000e+00 : f32
    %68 = vector.shape_cast %2 : vector<1x128xi1> to vector<1x128xi1>
    %69 = vector.broadcast %68 : vector<1x128xi1> to vector<16x128xi1>
    %70 = vector.broadcast %cst_36 : f32 to vector<16x128xf32>
    %71 = arith.select %69, %67, %70 : vector<16x128xi1>, vector<16x128xf32>
    %c127_i32_37 = arith.constant 127 : i32
    %72 = tpu.dynamic_rotate %66 by %c127_i32_37 dim 1 : vector<16x128xf32>, i32 -> vector<16x128xf32>
    %cst_38 = arith.constant 0.000000e+00 : f32
    %73 = vector.shape_cast %4 : vector<1x128xi1> to vector<1x128xi1>
    %74 = vector.broadcast %73 : vector<1x128xi1> to vector<16x128xi1>
    %75 = vector.broadcast %cst_38 : f32 to vector<16x128xf32>
    %76 = arith.select %74, %72, %75 : vector<16x128xi1>, vector<16x128xf32>
    %77 = tpu.concatenate %71, %66, %76 in 0 : vector<16x128xf32>, vector<16x128xf32>, vector<16x128xf32> -> vector<48x128xf32>
    %c0_39 = arith.constant 0 : index
    %c0_40 = arith.constant 0 : index
    %78 = vector.load %arg10[%c0_39, %c0_40] : memref<16x48xf32, #tpu.memory_space<vmem>>, vector<16x48xf32>
    %cst_41 = arith.constant dense<0.000000e+00> : vector<16x128xf32>
    %79 = tpu.matmul %78, %77, %cst_41 {dimension_numbers = #tpu.dot_dimension_numbers<[1], [0], [0], [1], [0, 0, 1, 1], [], []>} : vector<16x48xf32>, vector<48x128xf32>, vector<16x128xf32> -> vector<16x128xf32>
    %c0_42 = arith.constant 0 : index
    %c0_43 = arith.constant 0 : index
    %80 = vector.load %arg11[%c0_42, %c0_43] : memref<16x1xf32, #tpu.memory_space<vmem>>, vector<16x1xf32>
    %81 = vector.broadcast %80 : vector<16x1xf32> to vector<16x128xf32>
    %82 = arith.addf %79, %81 : vector<16x128xf32>
    %cst_44 = arith.constant 0.000000e+00 : f32
    %83 = vector.broadcast %cst_44 : f32 to vector<16x128xf32>
    %84 = arith.maximumf %82, %83 : vector<16x128xf32>
    %c1_i32_45 = arith.constant 1 : i32
    %85 = tpu.dynamic_rotate %84 by %c1_i32_45 dim 1 : vector<16x128xf32>, i32 -> vector<16x128xf32>
    %cst_46 = arith.constant 0.000000e+00 : f32
    %86 = vector.shape_cast %2 : vector<1x128xi1> to vector<1x128xi1>
    %87 = vector.broadcast %86 : vector<1x128xi1> to vector<16x128xi1>
    %88 = vector.broadcast %cst_46 : f32 to vector<16x128xf32>
    %89 = arith.select %87, %85, %88 : vector<16x128xi1>, vector<16x128xf32>
    %c127_i32_47 = arith.constant 127 : i32
    %90 = tpu.dynamic_rotate %84 by %c127_i32_47 dim 1 : vector<16x128xf32>, i32 -> vector<16x128xf32>
    %cst_48 = arith.constant 0.000000e+00 : f32
    %91 = vector.shape_cast %4 : vector<1x128xi1> to vector<1x128xi1>
    %92 = vector.broadcast %91 : vector<1x128xi1> to vector<16x128xi1>
    %93 = vector.broadcast %cst_48 : f32 to vector<16x128xf32>
    %94 = arith.select %92, %90, %93 : vector<16x128xi1>, vector<16x128xf32>
    %95 = tpu.concatenate %89, %84, %94 in 0 : vector<16x128xf32>, vector<16x128xf32>, vector<16x128xf32> -> vector<48x128xf32>
    %c0_49 = arith.constant 0 : index
    %c0_50 = arith.constant 0 : index
    %96 = vector.load %arg12[%c0_49, %c0_50] : memref<16x48xf32, #tpu.memory_space<vmem>>, vector<16x48xf32>
    %cst_51 = arith.constant dense<0.000000e+00> : vector<16x128xf32>
    %97 = tpu.matmul %96, %95, %cst_51 {dimension_numbers = #tpu.dot_dimension_numbers<[1], [0], [0], [1], [0, 0, 1, 1], [], []>} : vector<16x48xf32>, vector<48x128xf32>, vector<16x128xf32> -> vector<16x128xf32>
    %c0_52 = arith.constant 0 : index
    %c0_53 = arith.constant 0 : index
    %98 = vector.load %arg13[%c0_52, %c0_53] : memref<16x1xf32, #tpu.memory_space<vmem>>, vector<16x1xf32>
    %99 = vector.broadcast %98 : vector<16x1xf32> to vector<16x128xf32>
    %100 = arith.addf %97, %99 : vector<16x128xf32>
    %101 = arith.addf %100, %66 : vector<16x128xf32>
    %cst_54 = arith.constant 0.000000e+00 : f32
    %102 = vector.broadcast %cst_54 : f32 to vector<16x128xf32>
    %103 = arith.maximumf %101, %102 : vector<16x128xf32>
    %c1_i32_55 = arith.constant 1 : i32
    %104 = tpu.dynamic_rotate %103 by %c1_i32_55 dim 1 : vector<16x128xf32>, i32 -> vector<16x128xf32>
    %cst_56 = arith.constant 0.000000e+00 : f32
    %105 = vector.shape_cast %2 : vector<1x128xi1> to vector<1x128xi1>
    %106 = vector.broadcast %105 : vector<1x128xi1> to vector<16x128xi1>
    %107 = vector.broadcast %cst_56 : f32 to vector<16x128xf32>
    %108 = arith.select %106, %104, %107 : vector<16x128xi1>, vector<16x128xf32>
    %c127_i32_57 = arith.constant 127 : i32
    %109 = tpu.dynamic_rotate %103 by %c127_i32_57 dim 1 : vector<16x128xf32>, i32 -> vector<16x128xf32>
    %cst_58 = arith.constant 0.000000e+00 : f32
    %110 = vector.shape_cast %4 : vector<1x128xi1> to vector<1x128xi1>
    %111 = vector.broadcast %110 : vector<1x128xi1> to vector<16x128xi1>
    %112 = vector.broadcast %cst_58 : f32 to vector<16x128xf32>
    %113 = arith.select %111, %109, %112 : vector<16x128xi1>, vector<16x128xf32>
    %114 = tpu.concatenate %108, %103, %113 in 0 : vector<16x128xf32>, vector<16x128xf32>, vector<16x128xf32> -> vector<48x128xf32>
    %c0_59 = arith.constant 0 : index
    %c0_60 = arith.constant 0 : index
    %115 = vector.load %arg14[%c0_59, %c0_60] : memref<32x48xf32, #tpu.memory_space<vmem>>, vector<32x48xf32>
    %cst_61 = arith.constant dense<0.000000e+00> : vector<32x128xf32>
    %116 = tpu.matmul %115, %114, %cst_61 {dimension_numbers = #tpu.dot_dimension_numbers<[1], [0], [0], [1], [0, 0, 1, 1], [], []>} : vector<32x48xf32>, vector<48x128xf32>, vector<32x128xf32> -> vector<32x128xf32>
    %c0_62 = arith.constant 0 : index
    %c0_63 = arith.constant 0 : index
    %117 = vector.load %arg15[%c0_62, %c0_63] : memref<32x1xf32, #tpu.memory_space<vmem>>, vector<32x1xf32>
    %118 = vector.broadcast %117 : vector<32x1xf32> to vector<32x128xf32>
    %119 = arith.addf %116, %118 : vector<32x128xf32>
    %cst_64 = arith.constant 0.000000e+00 : f32
    %120 = vector.broadcast %cst_64 : f32 to vector<32x128xf32>
    %121 = arith.maximumf %119, %120 : vector<32x128xf32>
    %c1_i32_65 = arith.constant 1 : i32
    %122 = tpu.dynamic_rotate %121 by %c1_i32_65 dim 1 : vector<32x128xf32>, i32 -> vector<32x128xf32>
    %cst_66 = arith.constant 0.000000e+00 : f32
    %123 = vector.shape_cast %2 : vector<1x128xi1> to vector<1x128xi1>
    %124 = vector.broadcast %123 : vector<1x128xi1> to vector<32x128xi1>
    %125 = vector.broadcast %cst_66 : f32 to vector<32x128xf32>
    %126 = arith.select %124, %122, %125 : vector<32x128xi1>, vector<32x128xf32>
    %c127_i32_67 = arith.constant 127 : i32
    %127 = tpu.dynamic_rotate %121 by %c127_i32_67 dim 1 : vector<32x128xf32>, i32 -> vector<32x128xf32>
    %cst_68 = arith.constant 0.000000e+00 : f32
    %128 = vector.shape_cast %4 : vector<1x128xi1> to vector<1x128xi1>
    %129 = vector.broadcast %128 : vector<1x128xi1> to vector<32x128xi1>
    %130 = vector.broadcast %cst_68 : f32 to vector<32x128xf32>
    %131 = arith.select %129, %127, %130 : vector<32x128xi1>, vector<32x128xf32>
    %132 = tpu.concatenate %126, %121, %131 in 0 : vector<32x128xf32>, vector<32x128xf32>, vector<32x128xf32> -> vector<96x128xf32>
    %c0_69 = arith.constant 0 : index
    %c0_70 = arith.constant 0 : index
    %133 = vector.load %arg16[%c0_69, %c0_70] : memref<32x96xf32, #tpu.memory_space<vmem>>, vector<32x96xf32>
    %cst_71 = arith.constant dense<0.000000e+00> : vector<32x128xf32>
    %134 = tpu.matmul %133, %132, %cst_71 {dimension_numbers = #tpu.dot_dimension_numbers<[1], [0], [0], [1], [0, 0, 1, 1], [], []>} : vector<32x96xf32>, vector<96x128xf32>, vector<32x128xf32> -> vector<32x128xf32>
    %c0_72 = arith.constant 0 : index
    %c0_73 = arith.constant 0 : index
    %135 = vector.load %arg17[%c0_72, %c0_73] : memref<32x1xf32, #tpu.memory_space<vmem>>, vector<32x1xf32>
    %136 = vector.broadcast %135 : vector<32x1xf32> to vector<32x128xf32>
    %137 = arith.addf %134, %136 : vector<32x128xf32>
    %c0_74 = arith.constant 0 : index
    %c0_75 = arith.constant 0 : index
    %138 = vector.load %arg18[%c0_74, %c0_75] : memref<32x16xf32, #tpu.memory_space<vmem>>, vector<32x16xf32>
    %cst_76 = arith.constant dense<0.000000e+00> : vector<32x128xf32>
    %139 = tpu.matmul %138, %103, %cst_76 {dimension_numbers = #tpu.dot_dimension_numbers<[1], [0], [0], [1], [0, 0, 1, 1], [], []>} : vector<32x16xf32>, vector<16x128xf32>, vector<32x128xf32> -> vector<32x128xf32>
    %c0_77 = arith.constant 0 : index
    %c0_78 = arith.constant 0 : index
    %140 = vector.load %arg19[%c0_77, %c0_78] : memref<32x1xf32, #tpu.memory_space<vmem>>, vector<32x1xf32>
    %141 = vector.broadcast %140 : vector<32x1xf32> to vector<32x128xf32>
    %142 = arith.addf %139, %141 : vector<32x128xf32>
    %143 = arith.addf %137, %142 : vector<32x128xf32>
    %cst_79 = arith.constant 0.000000e+00 : f32
    %144 = vector.broadcast %cst_79 : f32 to vector<32x128xf32>
    %145 = arith.maximumf %143, %144 : vector<32x128xf32>
    %c1_i32_80 = arith.constant 1 : i32
    %146 = tpu.dynamic_rotate %145 by %c1_i32_80 dim 1 : vector<32x128xf32>, i32 -> vector<32x128xf32>
    %cst_81 = arith.constant 0.000000e+00 : f32
    %147 = vector.shape_cast %2 : vector<1x128xi1> to vector<1x128xi1>
    %148 = vector.broadcast %147 : vector<1x128xi1> to vector<32x128xi1>
    %149 = vector.broadcast %cst_81 : f32 to vector<32x128xf32>
    %150 = arith.select %148, %146, %149 : vector<32x128xi1>, vector<32x128xf32>
    %c127_i32_82 = arith.constant 127 : i32
    %151 = tpu.dynamic_rotate %145 by %c127_i32_82 dim 1 : vector<32x128xf32>, i32 -> vector<32x128xf32>
    %cst_83 = arith.constant 0.000000e+00 : f32
    %152 = vector.shape_cast %4 : vector<1x128xi1> to vector<1x128xi1>
    %153 = vector.broadcast %152 : vector<1x128xi1> to vector<32x128xi1>
    %154 = vector.broadcast %cst_83 : f32 to vector<32x128xf32>
    %155 = arith.select %153, %151, %154 : vector<32x128xi1>, vector<32x128xf32>
    %156 = tpu.concatenate %150, %145, %155 in 0 : vector<32x128xf32>, vector<32x128xf32>, vector<32x128xf32> -> vector<96x128xf32>
    %c0_84 = arith.constant 0 : index
    %c0_85 = arith.constant 0 : index
    %157 = vector.load %arg20[%c0_84, %c0_85] : memref<32x96xf32, #tpu.memory_space<vmem>>, vector<32x96xf32>
    %cst_86 = arith.constant dense<0.000000e+00> : vector<32x128xf32>
    %158 = tpu.matmul %157, %156, %cst_86 {dimension_numbers = #tpu.dot_dimension_numbers<[1], [0], [0], [1], [0, 0, 1, 1], [], []>} : vector<32x96xf32>, vector<96x128xf32>, vector<32x128xf32> -> vector<32x128xf32>
    %c0_87 = arith.constant 0 : index
    %c0_88 = arith.constant 0 : index
    %159 = vector.load %arg21[%c0_87, %c0_88] : memref<32x1xf32, #tpu.memory_space<vmem>>, vector<32x1xf32>
    %160 = vector.broadcast %159 : vector<32x1xf32> to vector<32x128xf32>
    %161 = arith.addf %158, %160 : vector<32x128xf32>
    %cst_89 = arith.constant 0.000000e+00 : f32
    %162 = vector.broadcast %cst_89 : f32 to vector<32x128xf32>
    %163 = arith.maximumf %161, %162 : vector<32x128xf32>
    %c1_i32_90 = arith.constant 1 : i32
    %164 = tpu.dynamic_rotate %163 by %c1_i32_90 dim 1 : vector<32x128xf32>, i32 -> vector<32x128xf32>
    %cst_91 = arith.constant 0.000000e+00 : f32
    %165 = vector.shape_cast %2 : vector<1x128xi1> to vector<1x128xi1>
    %166 = vector.broadcast %165 : vector<1x128xi1> to vector<32x128xi1>
    %167 = vector.broadcast %cst_91 : f32 to vector<32x128xf32>
    %168 = arith.select %166, %164, %167 : vector<32x128xi1>, vector<32x128xf32>
    %c127_i32_92 = arith.constant 127 : i32
    %169 = tpu.dynamic_rotate %163 by %c127_i32_92 dim 1 : vector<32x128xf32>, i32 -> vector<32x128xf32>
    %cst_93 = arith.constant 0.000000e+00 : f32
    %170 = vector.shape_cast %4 : vector<1x128xi1> to vector<1x128xi1>
    %171 = vector.broadcast %170 : vector<1x128xi1> to vector<32x128xi1>
    %172 = vector.broadcast %cst_93 : f32 to vector<32x128xf32>
    %173 = arith.select %171, %169, %172 : vector<32x128xi1>, vector<32x128xf32>
    %174 = tpu.concatenate %168, %163, %173 in 0 : vector<32x128xf32>, vector<32x128xf32>, vector<32x128xf32> -> vector<96x128xf32>
    %c0_94 = arith.constant 0 : index
    %c0_95 = arith.constant 0 : index
    %175 = vector.load %arg22[%c0_94, %c0_95] : memref<32x96xf32, #tpu.memory_space<vmem>>, vector<32x96xf32>
    %cst_96 = arith.constant dense<0.000000e+00> : vector<32x128xf32>
    %176 = tpu.matmul %175, %174, %cst_96 {dimension_numbers = #tpu.dot_dimension_numbers<[1], [0], [0], [1], [0, 0, 1, 1], [], []>} : vector<32x96xf32>, vector<96x128xf32>, vector<32x128xf32> -> vector<32x128xf32>
    %c0_97 = arith.constant 0 : index
    %c0_98 = arith.constant 0 : index
    %177 = vector.load %arg23[%c0_97, %c0_98] : memref<32x1xf32, #tpu.memory_space<vmem>>, vector<32x1xf32>
    %178 = vector.broadcast %177 : vector<32x1xf32> to vector<32x128xf32>
    %179 = arith.addf %176, %178 : vector<32x128xf32>
    %180 = arith.addf %179, %145 : vector<32x128xf32>
    %cst_99 = arith.constant 0.000000e+00 : f32
    %181 = vector.broadcast %cst_99 : f32 to vector<32x128xf32>
    %182 = arith.maximumf %180, %181 : vector<32x128xf32>
    %c1_i32_100 = arith.constant 1 : i32
    %183 = tpu.dynamic_rotate %182 by %c1_i32_100 dim 1 : vector<32x128xf32>, i32 -> vector<32x128xf32>
    %cst_101 = arith.constant 0.000000e+00 : f32
    %184 = vector.shape_cast %2 : vector<1x128xi1> to vector<1x128xi1>
    %185 = vector.broadcast %184 : vector<1x128xi1> to vector<32x128xi1>
    %186 = vector.broadcast %cst_101 : f32 to vector<32x128xf32>
    %187 = arith.select %185, %183, %186 : vector<32x128xi1>, vector<32x128xf32>
    %c127_i32_102 = arith.constant 127 : i32
    %188 = tpu.dynamic_rotate %182 by %c127_i32_102 dim 1 : vector<32x128xf32>, i32 -> vector<32x128xf32>
    %cst_103 = arith.constant 0.000000e+00 : f32
    %189 = vector.shape_cast %4 : vector<1x128xi1> to vector<1x128xi1>
    %190 = vector.broadcast %189 : vector<1x128xi1> to vector<32x128xi1>
    %191 = vector.broadcast %cst_103 : f32 to vector<32x128xf32>
    %192 = arith.select %190, %188, %191 : vector<32x128xi1>, vector<32x128xf32>
    %193 = tpu.concatenate %187, %182, %192 in 0 : vector<32x128xf32>, vector<32x128xf32>, vector<32x128xf32> -> vector<96x128xf32>
    %c0_104 = arith.constant 0 : index
    %c0_105 = arith.constant 0 : index
    %194 = vector.load %arg24[%c0_104, %c0_105] : memref<8x96xf32, #tpu.memory_space<vmem>>, vector<8x96xf32>
    %cst_106 = arith.constant dense<0.000000e+00> : vector<8x128xf32>
    %195 = tpu.matmul %194, %193, %cst_106 {dimension_numbers = #tpu.dot_dimension_numbers<[1], [0], [0], [1], [0, 0, 1, 1], [], []>} : vector<8x96xf32>, vector<96x128xf32>, vector<8x128xf32> -> vector<8x128xf32>
    %c0_107 = arith.constant 0 : index
    %c0_108 = arith.constant 0 : index
    %196 = vector.load %arg25[%c0_107, %c0_108] : memref<8x1xf32, #tpu.memory_space<vmem>>, vector<8x1xf32>
    %197 = vector.broadcast %196 : vector<8x1xf32> to vector<8x128xf32>
    %198 = arith.addf %195, %197 : vector<8x128xf32>
    %cst_109 = arith.constant 0.000000e+00 : f32
    %199 = vector.broadcast %cst_109 : f32 to vector<8x128xf32>
    %200 = arith.maximumf %198, %199 : vector<8x128xf32>
    %c0_110 = arith.constant 0 : index
    %c0_111 = arith.constant 0 : index
    %c0_112 = arith.constant 0 : index
    %201 = vector.load %arg26[%c0_110, %c0_111, %c0_112] : memref<1x8x128xf32, #tpu.memory_space<vmem>>, vector<1x8x128xf32>
    %202 = vector.shape_cast %201 : vector<1x8x128xf32> to vector<8x128xf32>
    %203 = vector.shape_cast %200 : vector<8x128xf32> to vector<1x8x128xf32>
    tpu.vector_store %arg26[%c0_110, %c0_111, %c0_112], %203 {strides = array<i32>} : memref<1x8x128xf32, #tpu.memory_space<vmem>>, vector<1x8x128xf32>,
    return
  }
  func.func @transform_0(%arg0: i32) -> (i32, i32, i32) {
    %c0_i32 = arith.constant 0 : i32
    %c0_i32_0 = arith.constant 0 : i32
    %c0_i32_1 = arith.constant 0 : i32
    return %arg0, %c0_i32, %c0_i32_0 : i32, i32, i32
  }
  func.func @transform_1(%arg0: i32) -> (i32, i32) {
    %c0_i32 = arith.constant 0 : i32
    %c0_i32_0 = arith.constant 0 : i32
    %c0_i32_1 = arith.constant 0 : i32
    return %c0_i32, %c0_i32_0 : i32, i32
  }
  func.func @transform_2(%arg0: i32) -> (i32, i32) {
    %c0_i32 = arith.constant 0 : i32
    %c0_i32_0 = arith.constant 0 : i32
    %c0_i32_1 = arith.constant 0 : i32
    return %c0_i32, %c0_i32_0 : i32, i32
  }
  func.func @transform_3(%arg0: i32) -> (i32, i32) {
    %c0_i32 = arith.constant 0 : i32
    %c0_i32_0 = arith.constant 0 : i32
    %c0_i32_1 = arith.constant 0 : i32
    return %c0_i32, %c0_i32_0 : i32, i32
  }
  func.func @transform_4(%arg0: i32) -> (i32, i32) {
    %c0_i32 = arith.constant 0 : i32
    %c0_i32_0 = arith.constant 0 : i32
    %c0_i32_1 = arith.constant 0 : i32
    return %c0_i32, %c0_i32_0 : i32, i32
  }
  func.func @transform_5(%arg0: i32) -> (i32, i32) {
    %c0_i32 = arith.constant 0 : i32
    %c0_i32_0 = arith.constant 0 : i32
    %c0_i32_1 = arith.constant 0 : i32
    return %c0_i32, %c0_i32_0 : i32, i32
  }
  func.func @transform_6(%arg0: i32) -> (i32, i32) {
    %c0_i32 = arith.constant 0 : i32
    %c0_i32_0 = arith.constant 0 : i32
    %c0_i32_1 = arith.constant 0 : i32
    return %c0_i32, %c0_i32_0 : i32, i32
  }
  func.func @transform_7(%arg0: i32) -> (i32, i32) {
    %c0_i32 = arith.constant 0 : i32
    %c0_i32_0 = arith.constant 0 : i32
    %c0_i32_1 = arith.constant 0 : i32
    return %c0_i32, %c0_i32_0 : i32, i32
  }
  func.func @transform_8(%arg0: i32) -> (i32, i32) {
    %c0_i32 = arith.constant 0 : i32
    %c0_i32_0 = arith.constant 0 : i32
    %c0_i32_1 = arith.constant 0 : i32
    return %c0_i32, %c0_i32_0 : i32, i32
  }
  func.func @transform_9(%arg0: i32) -> (i32, i32) {
    %c0_i32 = arith.constant 0 : i32
    %c0_i32_0 = arith.constant 0 : i32
    %c0_i32_1 = arith.constant 0 : i32
    return %c0_i32, %c0_i32_0 : i32, i32
  }
  func.func @transform_10(%arg0: i32) -> (i32, i32) {
    %c0_i32 = arith.constant 0 : i32
    %c0_i32_0 = arith.constant 0 : i32
    %c0_i32_1 = arith.constant 0 : i32
    return %c0_i32, %c0_i32_0 : i32, i32
  }
  func.func @transform_11(%arg0: i32) -> (i32, i32) {
    %c0_i32 = arith.constant 0 : i32
    %c0_i32_0 = arith.constant 0 : i32
    %c0_i32_1 = arith.constant 0 : i32
    return %c0_i32, %c0_i32_0 : i32, i32
  }
  func.func @transform_12(%arg0: i32) -> (i32, i32) {
    %c0_i32 = arith.constant 0 : i32
    %c0_i32_0 = arith.constant 0 : i32
    %c0_i32_1 = arith.constant 0 : i32
    return %c0_i32, %c0_i32_0 : i32, i32
  }
  func.func @transform_13(%arg0: i32) -> (i32, i32) {
    %c0_i32 = arith.constant 0 : i32
    %c0_i32_0 = arith.constant 0 : i32
    %c0_i32_1 = arith.constant 0 : i32
    return %c0_i32, %c0_i32_0 : i32, i32
  }
  func.func @transform_14(%arg0: i32) -> (i32, i32) {
    %c0_i32 = arith.constant 0 : i32
    %c0_i32_0 = arith.constant 0 : i32
    %c0_i32_1 = arith.constant 0 : i32
    return %c0_i32, %c0_i32_0 : i32, i32
  }
  func.func @transform_15(%arg0: i32) -> (i32, i32) {
    %c0_i32 = arith.constant 0 : i32
    %c0_i32_0 = arith.constant 0 : i32
    %c0_i32_1 = arith.constant 0 : i32
    return %c0_i32, %c0_i32_0 : i32, i32
  }
  func.func @transform_16(%arg0: i32) -> (i32, i32) {
    %c0_i32 = arith.constant 0 : i32
    %c0_i32_0 = arith.constant 0 : i32
    %c0_i32_1 = arith.constant 0 : i32
    return %c0_i32, %c0_i32_0 : i32, i32
  }
  func.func @transform_17(%arg0: i32) -> (i32, i32) {
    %c0_i32 = arith.constant 0 : i32
    %c0_i32_0 = arith.constant 0 : i32
    %c0_i32_1 = arith.constant 0 : i32
    return %c0_i32, %c0_i32_0 : i32, i32
  }
  func.func @transform_18(%arg0: i32) -> (i32, i32) {
    %c0_i32 = arith.constant 0 : i32
    %c0_i32_0 = arith.constant 0 : i32
    %c0_i32_1 = arith.constant 0 : i32
    return %c0_i32, %c0_i32_0 : i32, i32
  }
  func.func @transform_19(%arg0: i32) -> (i32, i32) {
    %c0_i32 = arith.constant 0 : i32
    %c0_i32_0 = arith.constant 0 : i32
    %c0_i32_1 = arith.constant 0 : i32
    return %c0_i32, %c0_i32_0 : i32, i32
  }
  func.func @transform_20(%arg0: i32) -> (i32, i32) {
    %c0_i32 = arith.constant 0 : i32
    %c0_i32_0 = arith.constant 0 : i32
    %c0_i32_1 = arith.constant 0 : i32
    return %c0_i32, %c0_i32_0 : i32, i32
  }
  func.func @transform_21(%arg0: i32) -> (i32, i32) {
    %c0_i32 = arith.constant 0 : i32
    %c0_i32_0 = arith.constant 0 : i32
    %c0_i32_1 = arith.constant 0 : i32
    return %c0_i32, %c0_i32_0 : i32, i32
  }
  func.func @transform_22(%arg0: i32) -> (i32, i32) {
    %c0_i32 = arith.constant 0 : i32
    %c0_i32_0 = arith.constant 0 : i32
    %c0_i32_1 = arith.constant 0 : i32
    return %c0_i32, %c0_i32_0 : i32, i32
  }
  func.func @transform_23(%arg0: i32) -> (i32, i32) {
    %c0_i32 = arith.constant 0 : i32
    %c0_i32_0 = arith.constant 0 : i32
    %c0_i32_1 = arith.constant 0 : i32
    return %c0_i32, %c0_i32_0 : i32, i32
  }
  func.func @transform_24(%arg0: i32) -> (i32, i32) {
    %c0_i32 = arith.constant 0 : i32
    %c0_i32_0 = arith.constant 0 : i32
    %c0_i32_1 = arith.constant 0 : i32
    return %c0_i32, %c0_i32_0 : i32, i32
  }
  func.func @transform_25(%arg0: i32) -> (i32, i32, i32) {
    %c0_i32 = arith.constant 0 : i32
    %c0_i32_0 = arith.constant 0 : i32
    %c0_i32_1 = arith.constant 0 : i32
    return %arg0, %c0_i32, %c0_i32_0 : i32, i32, i32
  }
}

</mosaic_0001>

<llo_original>
// kernel: resnet1d_forward.1
$region0: #{resnet1d_forward.1}
  #allocation0 [shape = 'u32[]', space=smem, size = 0x4, offset = 0x4, fixed_abs, tag = 'smem constant byte address 0x4 - core index']
  #allocation1 [shape = 'u32[144,128]{1,0:T(1,128)}', space=vmem, size = 0x12000, scoped, tag = 'internal scratch']
  %s0 = inlined_call_operand.vmem [shape: f32[2,8,128], index: 0, kind: input, shape index: {}]
  %s1 = inlined_call_operand.vmem [shape: f32[8,24], index: 1, kind: input, shape index: {}]
  %s2 = inlined_call_operand.vmem [shape: f32[8,1], index: 2, kind: input, shape index: {}]
  %s3 = inlined_call_operand.vmem [shape: f32[16,24], index: 3, kind: input, shape index: {}]
  %s4 = inlined_call_operand.vmem [shape: f32[16,1], index: 4, kind: input, shape index: {}]
  %s5 = inlined_call_operand.vmem [shape: f32[16,48], index: 5, kind: input, shape index: {}]
  %s6 = inlined_call_operand.vmem [shape: f32[16,1], index: 6, kind: input, shape index: {}]
  %s7 = inlined_call_operand.vmem [shape: f32[16,8], index: 7, kind: input, shape index: {}]
  %s8 = inlined_call_operand.vmem [shape: f32[16,1], index: 8, kind: input, shape index: {}]
  %s9 = inlined_call_operand.vmem [shape: f32[16,48], index: 9, kind: input, shape index: {}]
  %s10 = inlined_call_operand.vmem [shape: f32[16,1], index: 10, kind: input, shape index: {}]
  %s11 = inlined_call_operand.vmem [shape: f32[16,48], index: 11, kind: input, shape index: {}]
  %s12 = inlined_call_operand.vmem [shape: f32[16,1], index: 12, kind: input, shape index: {}]
  %s13 = inlined_call_operand.vmem [shape: f32[32,48], index: 13, kind: input, shape index: {}]
  %s14 = inlined_call_operand.vmem [shape: f32[32,1], index: 14, kind: input, shape index: {}]
  %s15 = inlined_call_operand.vmem [shape: f32[32,96], index: 15, kind: input, shape index: {}]
  %s16 = inlined_call_operand.vmem [shape: f32[32,1], index: 16, kind: input, shape index: {}]
  %s17 = inlined_call_operand.vmem [shape: f32[32,16], index: 17, kind: input, shape index: {}]
  %s18 = inlined_call_operand.vmem [shape: f32[32,1], index: 18, kind: input, shape index: {}]
  %s19 = inlined_call_operand.vmem [shape: f32[32,96], index: 19, kind: input, shape index: {}]
  %s20 = inlined_call_operand.vmem [shape: f32[32,1], index: 20, kind: input, shape index: {}]
  %s21 = inlined_call_operand.vmem [shape: f32[32,96], index: 21, kind: input, shape index: {}]
  %s22 = inlined_call_operand.vmem [shape: f32[32,1], index: 22, kind: input, shape index: {}]
  %s23 = inlined_call_operand.vmem [shape: f32[8,96], index: 23, kind: input, shape index: {}]
  %s24 = inlined_call_operand.vmem [shape: f32[8,1], index: 24, kind: input, shape index: {}]
  %s25 = inlined_call_operand.hbm [shape: f32[2,8,128], index: 25, kind: output, shape index: {}]
  %s26 = sld [smem:[#allocation0]]
  $region133: #{resnet1d_forward.1} parent=0
    _
  %s28 = ssub.s32 1, %s26
  %s29 = scalar_select 0, %s28, %s26
  $region1: #{resnet1d_forward.1} parent=0
    #allocation2 [shape = 'u8[8192]{0}', space=vmem, size = 0x2000, scoped, tag = 'output window, operand 0']
    #allocation3 [shape = 's32[2]{0}', space=sflag, size = 0x8, scoped, tag = 'scoped memory for resnet1d_forward.1']
    %30 = vsyncpa [#allocation3], 0
    %s31 = scalar_lea.sflag [#allocation3], 1
    %32 = vsyncpa %s31, 0
    loop: start=0, step=1, limit=4
    $region2: #{resnet1d_forward.1} parent=1 // loop_pre_header
      _
    $region3: #{resnet1d_forward.1} parent=1 // loop_header
      %s34 = sphi 0, %s38
      %p35 = scmp.ge.s32.totalorder %s34, 4
      %s44 = sphi 0, %s46
      %s47 = sphi 0, %s44
      %s48 = sphi 0, %s47
      %s64 = sphi 0, %s48
      %s68 = sphi 0, %s68
      %s70 = sphi 0, %s68
      %s71 = sphi 0, %s70
      %s85 = sphi 0, %s71
      %s89 = sphi 0, %s89
      %s91 = sphi 0, %s89
      %s92 = sphi 0, %s91
      %s106 = sphi 0, %s92
      %s110 = sphi 0, %s110
      %s112 = sphi 0, %s110
      %s113 = sphi 0, %s112
      %s127 = sphi 0, %s113
      %s131 = sphi 0, %s131
      %s133 = sphi 0, %s131
      %s134 = sphi 0, %s133
      %s148 = sphi 0, %s134
      %s152 = sphi 0, %s152
      %s154 = sphi 0, %s152
      %s155 = sphi 0, %s154
      %s169 = sphi 0, %s155
      %s173 = sphi 0, %s173
      %s175 = sphi 0, %s173
      %s176 = sphi 0, %s175
      %s190 = sphi 0, %s176
      %s194 = sphi 0, %s194
      %s196 = sphi 0, %s194
      %s197 = sphi 0, %s196
      %s211 = sphi 0, %s197
      %s215 = sphi 0, %s215
      %s217 = sphi 0, %s215
      %s218 = sphi 0, %s217
      %s232 = sphi 0, %s218
      %s236 = sphi 0, %s236
      %s238 = sphi 0, %s236
      %s239 = sphi 0, %s238
      %s253 = sphi 0, %s239
      %s257 = sphi 0, %s257
      %s259 = sphi 0, %s257
      %s260 = sphi 0, %s259
      %s274 = sphi 0, %s260
      %s278 = sphi 0, %s278
      %s280 = sphi 0, %s278
      %s281 = sphi 0, %s280
      %s295 = sphi 0, %s281
      %s299 = sphi 0, %s299
      %s301 = sphi 0, %s299
      %s302 = sphi 0, %s301
      %s316 = sphi 0, %s302
      %s320 = sphi 0, %s320
      %s322 = sphi 0, %s320
      %s323 = sphi 0, %s322
      %s337 = sphi 0, %s323
      %s341 = sphi 0, %s341
      %s343 = sphi 0, %s341
      %s344 = sphi 0, %s343
      %s358 = sphi 0, %s344
      %s362 = sphi 0, %s362
      %s364 = sphi 0, %s362
      %s365 = sphi 0, %s364
      %s379 = sphi 0, %s365
      %s383 = sphi 0, %s383
      %s385 = sphi 0, %s383
      %s386 = sphi 0, %s385
      %s400 = sphi 0, %s386
      %s404 = sphi 0, %s404
      %s406 = sphi 0, %s404
      %s407 = sphi 0, %s406
      %s421 = sphi 0, %s407
      %s425 = sphi 0, %s425
      %s427 = sphi 0, %s425
      %s428 = sphi 0, %s427
      %s442 = sphi 0, %s428
      %s446 = sphi 0, %s446
      %s448 = sphi 0, %s446
      %s449 = sphi 0, %s448
      %s463 = sphi 0, %s449
      %s467 = sphi 0, %s467
      %s469 = sphi 0, %s467
      %s470 = sphi 0, %s469
      %s484 = sphi 0, %s470
      %s488 = sphi 0, %s488
      %s490 = sphi 0, %s488
      %s491 = sphi 0, %s490
      %s505 = sphi 0, %s491
      %s509 = sphi 0, %s509
      %s511 = sphi 0, %s509
      %s512 = sphi 0, %s511
      %s526 = sphi 0, %s512
      %s530 = sphi 0, %s530
      %s532 = sphi 0, %s530
      %s533 = sphi 0, %s532
      %s547 = sphi 0, %s533
      %s551 = sphi 0, %s551
      %s553 = sphi 0, %s551
      %s554 = sphi 0, %s553
      %s568 = sphi 0, %s554
      %s574 = sphi 0, %s576
      %s577 = sphi 0, %s574
      %s578 = sphi 0, %s577
      %s594 = sphi 0, %s578
    $region4: #{resnet1d_forward.1} parent=1 // loop_header_branch
      %37 = sbr.rel (%p35) target = $region8
    $region5: #{resnet1d_forward.1} parent=1 // loop_body
      %s39 = ssub.s32 %s34, 1
      %s40 = ssub.s32 %s34, 2
      %s41 = sadd.s32 %s34, 1
      %s42 = ssub.s32 %s34, %s41
      %p43 = scmp.eq.s32.totalorder %s42, 0
      %s45 = sadd.s32 %s44, 1
      %s46 = scalar_select %p43, %s44, %s45
      %p49 = pneg %p43
      %p50 = scmp.eq.s32.totalorder %s34, 1
      %p51 = por %p49, %p50
      %p52 = scmp.ne.s32.totalorder %s44, %s47
      %p53 = scmp.eq.s32.totalorder %s34, 0
      %p54 = por %p52, %p53
      %p55 = scmp.ne.s32.totalorder %s44, %s47
      %p56 = scmp.eq.s32.totalorder %s39, 1
      %p57 = por %p55, %p56
      %p58 = scmp.ne.s32.totalorder %s47, %s48
      %p59 = scmp.eq.s32.totalorder %s39, 0
      %p60 = por %p58, %p59
      %p61 = scmp.ne.s32.totalorder %s47, %s48
      %p62 = scmp.eq.s32.totalorder %s40, 1
      %p63 = por %p61, %p62
      %p65 = scmp.ne.s32.totalorder %s48, %s64
      %p66 = scmp.eq.s32.totalorder %s40, 0
      %p67 = por %p65, %p66
      %s69 = sadd.s32 %s68, 1
      %p72 = scmp.eq.s32.totalorder %s34, 1
      %p73 = scmp.ne.s32.totalorder %s68, %s70
      %p74 = scmp.eq.s32.totalorder %s34, 0
      %p75 = por %p73, %p74
      %p76 = scmp.ne.s32.totalorder %s68, %s70
      %p77 = scmp.eq.s32.totalorder %s39, 1
      %p78 = por %p76, %p77
      %p79 = scmp.ne.s32.totalorder %s70, %s71
      %p80 = scmp.eq.s32.totalorder %s39, 0
      %p81 = por %p79, %p80
      %p82 = scmp.ne.s32.totalorder %s70, %s71
      %p83 = scmp.eq.s32.totalorder %s40, 1
      %p84 = por %p82, %p83
      %p86 = scmp.ne.s32.totalorder %s71, %s85
      %p87 = scmp.eq.s32.totalorder %s40, 0
      %p88 = por %p86, %p87
      %s90 = sadd.s32 %s89, 1
      %p93 = scmp.eq.s32.totalorder %s34, 1
      %p94 = scmp.ne.s32.totalorder %s89, %s91
      %p95 = scmp.eq.s32.totalorder %s34, 0
      %p96 = por %p94, %p95
      %p97 = scmp.ne.s32.totalorder %s89, %s91
      %p98 = scmp.eq.s32.totalorder %s39, 1
      %p99 = por %p97, %p98
      %p100 = scmp.ne.s32.totalorder %s91, %s92
      %p101 = scmp.eq.s32.totalorder %s39, 0
      %p102 = por %p100, %p101
      %p103 = scmp.ne.s32.totalorder %s91, %s92
      %p104 = scmp.eq.s32.totalorder %s40, 1
      %p105 = por %p103, %p104
      %p107 = scmp.ne.s32.totalorder %s92, %s106
      %p108 = scmp.eq.s32.totalorder %s40, 0
      %p109 = por %p107, %p108
      %s111 = sadd.s32 %s110, 1
      %p114 = scmp.eq.s32.totalorder %s34, 1
      %p115 = scmp.ne.s32.totalorder %s110, %s112
      %p116 = scmp.eq.s32.totalorder %s34, 0
      %p117 = por %p115, %p116
      %p118 = scmp.ne.s32.totalorder %s110, %s112
      %p119 = scmp.eq.s32.totalorder %s39, 1
      %p120 = por %p118, %p119
      %p121 = scmp.ne.s32.totalorder %s112, %s113
      %p122 = scmp.eq.s32.totalorder %s39, 0
      %p123 = por %p121, %p122
      %p124 = scmp.ne.s32.totalorder %s112, %s113
      %p125 = scmp.eq.s32.totalorder %s40, 1
      %p126 = por %p124, %p125
      %p128 = scmp.ne.s32.totalorder %s113, %s127
      %p129 = scmp.eq.s32.totalorder %s40, 0
      %p130 = por %p128, %p129
      %s132 = sadd.s32 %s131, 1
      %p135 = scmp.eq.s32.totalorder %s34, 1
      %p136 = scmp.ne.s32.totalorder %s131, %s133
      %p137 = scmp.eq.s32.totalorder %s34, 0
      %p138 = por %p136, %p137
      %p139 = scmp.ne.s32.totalorder %s131, %s133
      %p140 = scmp.eq.s32.totalorder %s39, 1
      %p141 = por %p139, %p140
      %p142 = scmp.ne.s32.totalorder %s133, %s134
      %p143 = scmp.eq.s32.totalorder %s39, 0
      %p144 = por %p142, %p143
      %p145 = scmp.ne.s32.totalorder %s133, %s134
      %p146 = scmp.eq.s32.totalorder %s40, 1
      %p147 = por %p145, %p146
      %p149 = scmp.ne.s32.totalorder %s134, %s148
      %p150 = scmp.eq.s32.totalorder %s40, 0
      %p151 = por %p149, %p150
      %s153 = sadd.s32 %s152, 1
      %p156 = scmp.eq.s32.totalorder %s34, 1
      %p157 = scmp.ne.s32.totalorder %s152, %s154
      %p158 = scmp.eq.s32.totalorder %s34, 0
      %p159 = por %p157, %p158
      %p160 = scmp.ne.s32.totalorder %s152, %s154
      %p161 = scmp.eq.s32.totalorder %s39, 1
      %p162 = por %p160, %p161
      %p163 = scmp.ne.s32.totalorder %s154, %s155
      %p164 = scmp.eq.s32.totalorder %s39, 0
      %p165 = por %p163, %p164
      %p166 = scmp.ne.s32.totalorder %s154, %s155
      %p167 = scmp.eq.s32.totalorder %s40, 1
      %p168 = por %p166, %p167
      %p170 = scmp.ne.s32.totalorder %s155, %s169
      %p171 = scmp.eq.s32.totalorder %s40, 0
      %p172 = por %p170, %p171
      %s174 = sadd.s32 %s173, 1
      %p177 = scmp.eq.s32.totalorder %s34, 1
      %p178 = scmp.ne.s32.totalorder %s173, %s175
      %p179 = scmp.eq.s32.totalorder %s34, 0
      %p180 = por %p178, %p179
      %p181 = scmp.ne.s32.totalorder %s173, %s175
      %p182 = scmp.eq.s32.totalorder %s39, 1
      %p183 = por %p181, %p182
      %p184 = scmp.ne.s32.totalorder %s175, %s176
      %p185 = scmp.eq.s32.totalorder %s39, 0
      %p186 = por %p184, %p185
      %p187 = scmp.ne.s32.totalorder %s175, %s176
      %p188 = scmp.eq.s32.totalorder %s40, 1
      %p189 = por %p187, %p188
      %p191 = scmp.ne.s32.totalorder %s176, %s190
      %p192 = scmp.eq.s32.totalorder %s40, 0
      %p193 = por %p191, %p192
      %s195 = sadd.s32 %s194, 1
      %p198 = scmp.eq.s32.totalorder %s34, 1
      %p199 = scmp.ne.s32.totalorder %s194, %s196
      %p200 = scmp.eq.s32.totalorder %s34, 0
      %p201 = por %p199, %p200
      %p202 = scmp.ne.s32.totalorder %s194, %s196
      %p203 = scmp.eq.s32.totalorder %s39, 1
      %p204 = por %p202, %p203
      %p205 = scmp.ne.s32.totalorder %s196, %s197
      %p206 = scmp.eq.s32.totalorder %s39, 0
      %p207 = por %p205, %p206
      %p208 = scmp.ne.s32.totalorder %s196, %s197
      %p209 = scmp.eq.s32.totalorder %s40, 1
      %p210 = por %p208, %p209
      %p212 = scmp.ne.s32.totalorder %s197, %s211
      %p213 = scmp.eq.s32.totalorder %s40, 0
      %p214 = por %p212, %p213
      %s216 = sadd.s32 %s215, 1
      %p219 = scmp.eq.s32.totalorder %s34, 1
      %p220 = scmp.ne.s32.totalorder %s215, %s217
      %p221 = scmp.eq.s32.totalorder %s34, 0
      %p222 = por %p220, %p221
      %p223 = scmp.ne.s32.totalorder %s215, %s217
      %p224 = scmp.eq.s32.totalorder %s39, 1
      %p225 = por %p223, %p224
      %p226 = scmp.ne.s32.totalorder %s217, %s218
      %p227 = scmp.eq.s32.totalorder %s39, 0
      %p228 = por %p226, %p227
      %p229 = scmp.ne.s32.totalorder %s217, %s218
      %p230 = scmp.eq.s32.totalorder %s40, 1
      %p231 = por %p229, %p230
      %p233 = scmp.ne.s32.totalorder %s218, %s232
      %p234 = scmp.eq.s32.totalorder %s40, 0
      %p235 = por %p233, %p234
      %s237 = sadd.s32 %s236, 1
      %p240 = scmp.eq.s32.totalorder %s34, 1
      %p241 = scmp.ne.s32.totalorder %s236, %s238
      %p242 = scmp.eq.s32.totalorder %s34, 0
      %p243 = por %p241, %p242
      %p244 = scmp.ne.s32.totalorder %s236, %s238
      %p245 = scmp.eq.s32.totalorder %s39, 1
      %p246 = por %p244, %p245
      %p247 = scmp.ne.s32.totalorder %s238, %s239
      %p248 = scmp.eq.s32.totalorder %s39, 0
      %p249 = por %p247, %p248
      %p250 = scmp.ne.s32.totalorder %s238, %s239
      %p251 = scmp.eq.s32.totalorder %s40, 1
      %p252 = por %p250, %p251
      %p254 = scmp.ne.s32.totalorder %s239, %s253
      %p255 = scmp.eq.s32.totalorder %s40, 0
      %p256 = por %p254, %p255
      %s258 = sadd.s32 %s257, 1
      %p261 = scmp.eq.s32.totalorder %s34, 1
      %p262 = scmp.ne.s32.totalorder %s257, %s259
      %p263 = scmp.eq.s32.totalorder %s34, 0
      %p264 = por %p262, %p263
      %p265 = scmp.ne.s32.totalorder %s257, %s259
      %p266 = scmp.eq.s32.totalorder %s39, 1
      %p267 = por %p265, %p266
      %p268 = scmp.ne.s32.totalorder %s259, %s260
      %p269 = scmp.eq.s32.totalorder %s39, 0
      %p270 = por %p268, %p269
      %p271 = scmp.ne.s32.totalorder %s259, %s260
      %p272 = scmp.eq.s32.totalorder %s40, 1
      %p273 = por %p271, %p272
      %p275 = scmp.ne.s32.totalorder %s260, %s274
      %p276 = scmp.eq.s32.totalorder %s40, 0
      %p277 = por %p275, %p276
      %s279 = sadd.s32 %s278, 1
      %p282 = scmp.eq.s32.totalorder %s34, 1
      %p283 = scmp.ne.s32.totalorder %s278, %s280
      %p284 = scmp.eq.s32.totalorder %s34, 0
      %p285 = por %p283, %p284
      %p286 = scmp.ne.s32.totalorder %s278, %s280
      %p287 = scmp.eq.s32.totalorder %s39, 1
      %p288 = por %p286, %p287
      %p289 = scmp.ne.s32.totalorder %s280, %s281
      %p290 = scmp.eq.s32.totalorder %s39, 0
      %p291 = por %p289, %p290
      %p292 = scmp.ne.s32.totalorder %s280, %s281
      %p293 = scmp.eq.s32.totalorder %s40, 1
      %p294 = por %p292, %p293
      %p296 = scmp.ne.s32.totalorder %s281, %s295
      %p297 = scmp.eq.s32.totalorder %s40, 0
      %p298 = por %p296, %p297
      %s300 = sadd.s32 %s299, 1
      %p303 = scmp.eq.s32.totalorder %s34, 1
      %p304 = scmp.ne.s32.totalorder %s299, %s301
      %p305 = scmp.eq.s32.totalorder %s34, 0
      %p306 = por %p304, %p305
      %p307 = scmp.ne.s32.totalorder %s299, %s301
      %p308 = scmp.eq.s32.totalorder %s39, 1
      %p309 = por %p307, %p308
      %p310 = scmp.ne.s32.totalorder %s301, %s302
      %p311 = scmp.eq.s32.totalorder %s39, 0
      %p312 = por %p310, %p311
      %p313 = scmp.ne.s32.totalorder %s301, %s302
      %p314 = scmp.eq.s32.totalorder %s40, 1
      %p315 = por %p313, %p314
      %p317 = scmp.ne.s32.totalorder %s302, %s316
      %p318 = scmp.eq.s32.totalorder %s40, 0
      %p319 = por %p317, %p318
      %s321 = sadd.s32 %s320, 1
      %p324 = scmp.eq.s32.totalorder %s34, 1
      %p325 = scmp.ne.s32.totalorder %s320, %s322
      %p326 = scmp.eq.s32.totalorder %s34, 0
      %p327 = por %p325, %p326
      %p328 = scmp.ne.s32.totalorder %s320, %s322
      %p329 = scmp.eq.s32.totalorder %s39, 1
      %p330 = por %p328, %p329
      %p331 = scmp.ne.s32.totalorder %s322, %s323
      %p332 = scmp.eq.s32.totalorder %s39, 0
      %p333 = por %p331, %p332
      %p334 = scmp.ne.s32.totalorder %s322, %s323
      %p335 = scmp.eq.s32.totalorder %s40, 1
      %p336 = por %p334, %p335
      %p338 = scmp.ne.s32.totalorder %s323, %s337
      %p339 = scmp.eq.s32.totalorder %s40, 0
      %p340 = por %p338, %p339
      %s342 = sadd.s32 %s341, 1
      %p345 = scmp.eq.s32.totalorder %s34, 1
      %p346 = scmp.ne.s32.totalorder %s341, %s343
      %p347 = scmp.eq.s32.totalorder %s34, 0
      %p348 = por %p346, %p347
      %p349 = scmp.ne.s32.totalorder %s341, %s343
      %p350 = scmp.eq.s32.totalorder %s39, 1
      %p351 = por %p349, %p350
      %p352 = scmp.ne.s32.totalorder %s343, %s344
      %p353 = scmp.eq.s32.totalorder %s39, 0
      %p354 = por %p352, %p353
      %p355 = scmp.ne.s32.totalorder %s343, %s344
      %p356 = scmp.eq.s32.totalorder %s40, 1
      %p357 = por %p355, %p356
      %p359 = scmp.ne.s32.totalorder %s344, %s358
      %p360 = scmp.eq.s32.totalorder %s40, 0
      %p361 = por %p359, %p360
      %s363 = sadd.s32 %s362, 1
      %p366 = scmp.eq.s32.totalorder %s34, 1
      %p367 = scmp.ne.s32.totalorder %s362, %s364
      %p368 = scmp.eq.s32.totalorder %s34, 0
      %p369 = por %p367, %p368
      %p370 = scmp.ne.s32.totalorder %s362, %s364
      %p371 = scmp.eq.s32.totalorder %s39, 1
      %p372 = por %p370, %p371
      %p373 = scmp.ne.s32.totalorder %s364, %s365
      %p374 = scmp.eq.s32.totalorder %s39, 0
      %p375 = por %p373, %p374
      %p376 = scmp.ne.s32.totalorder %s364, %s365
      %p377 = scmp.eq.s32.totalorder %s40, 1
      %p378 = por %p376, %p377
      %p380 = scmp.ne.s32.totalorder %s365, %s379
      %p381 = scmp.eq.s32.totalorder %s40, 0
      %p382 = por %p380, %p381
      %s384 = sadd.s32 %s383, 1
      %p387 = scmp.eq.s32.totalorder %s34, 1
      %p388 = scmp.ne.s32.totalorder %s383, %s385
      %p389 = scmp.eq.s32.totalorder %s34, 0
      %p390 = por %p388, %p389
      %p391 = scmp.ne.s32.totalorder %s383, %s385
      %p392 = scmp.eq.s32.totalorder %s39, 1
      %p393 = por %p391, %p392
      %p394 = scmp.ne.s32.totalorder %s385, %s386
      %p395 = scmp.eq.s32.totalorder %s39, 0
      %p396 = por %p394, %p395
      %p397 = scmp.ne.s32.totalorder %s385, %s386
      %p398 = scmp.eq.s32.totalorder %s40, 1
      %p399 = por %p397, %p398
      %p401 = scmp.ne.s32.totalorder %s386, %s400
      %p402 = scmp.eq.s32.totalorder %s40, 0
      %p403 = por %p401, %p402
      %s405 = sadd.s32 %s404, 1
      %p408 = scmp.eq.s32.totalorder %s34, 1
      %p409 = scmp.ne.s32.totalorder %s404, %s406
      %p410 = scmp.eq.s32.totalorder %s34, 0
      %p411 = por %p409, %p410
      %p412 = scmp.ne.s32.totalorder %s404, %s406
      %p413 = scmp.eq.s32.totalorder %s39, 1
      %p414 = por %p412, %p413
      %p415 = scmp.ne.s32.totalorder %s406, %s407
      %p416 = scmp.eq.s32.totalorder %s39, 0
      %p417 = por %p415, %p416
      %p418 = scmp.ne.s32.totalorder %s406, %s407
      %p419 = scmp.eq.s32.totalorder %s40, 1
      %p420 = por %p418, %p419
      %p422 = scmp.ne.s32.totalorder %s407, %s421
      %p423 = scmp.eq.s32.totalorder %s40, 0
      %p424 = por %p422, %p423
      %s426 = sadd.s32 %s425, 1
      %p429 = scmp.eq.s32.totalorder %s34, 1
      %p430 = scmp.ne.s32.totalorder %s425, %s427
      %p431 = scmp.eq.s32.totalorder %s34, 0
      %p432 = por %p430, %p431
      %p433 = scmp.ne.s32.totalorder %s425, %s427
      %p434 = scmp.eq.s32.totalorder %s39, 1
      %p435 = por %p433, %p434
      %p436 = scmp.ne.s32.totalorder %s427, %s428
      %p437 = scmp.eq.s32.totalorder %s39, 0
      %p438 = por %p436, %p437
      %p439 = scmp.ne.s32.totalorder %s427, %s428
      %p440 = scmp.eq.s32.totalorder %s40, 1
      %p441 = por %p439, %p440
      %p443 = scmp.ne.s32.totalorder %s428, %s442
      %p444 = scmp.eq.s32.totalorder %s40, 0
      %p445 = por %p443, %p444
      %s447 = sadd.s32 %s446, 1
      %p450 = scmp.eq.s32.totalorder %s34, 1
      %p451 = scmp.ne.s32.totalorder %s446, %s448
      %p452 = scmp.eq.s32.totalorder %s34, 0
      %p453 = por %p451, %p452
      %p454 = scmp.ne.s32.totalorder %s446, %s448
      %p455 = scmp.eq.s32.totalorder %s39, 1
      %p456 = por %p454, %p455
      %p457 = scmp.ne.s32.totalorder %s448, %s449
      %p458 = scmp.eq.s32.totalorder %s39, 0
      %p459 = por %p457, %p458
      %p460 = scmp.ne.s32.totalorder %s448, %s449
      %p461 = scmp.eq.s32.totalorder %s40, 1
      %p462 = por %p460, %p461
      %p464 = scmp.ne.s32.totalorder %s449, %s463
      %p465 = scmp.eq.s32.totalorder %s40, 0
      %p466 = por %p464, %p465
      %s468 = sadd.s32 %s467, 1
      %p471 = scmp.eq.s32.totalorder %s34, 1
      %p472 = scmp.ne.s32.totalorder %s467, %s469
      %p473 = scmp.eq.s32.totalorder %s34, 0
      %p474 = por %p472, %p473
      %p475 = scmp.ne.s32.totalorder %s467, %s469
      %p476 = scmp.eq.s32.totalorder %s39, 1
      %p477 = por %p475, %p476
      %p478 = scmp.ne.s32.totalorder %s469, %s470
      %p479 = scmp.eq.s32.totalorder %s39, 0
      %p480 = por %p478, %p479
      %p481 = scmp.ne.s32.totalorder %s469, %s470
      %p482 = scmp.eq.s32.totalorder %s40, 1
      %p483 = por %p481, %p482
      %p485 = scmp.ne.s32.totalorder %s470, %s484
      %p486 = scmp.eq.s32.totalorder %s40, 0
      %p487 = por %p485, %p486
      %s489 = sadd.s32 %s488, 1
      %p492 = scmp.eq.s32.totalorder %s34, 1
      %p493 = scmp.ne.s32.totalorder %s488, %s490
      %p494 = scmp.eq.s32.totalorder %s34, 0
      %p495 = por %p493, %p494
      %p496 = scmp.ne.s32.totalorder %s488, %s490
      %p497 = scmp.eq.s32.totalorder %s39, 1
      %p498 = por %p496, %p497
      %p499 = scmp.ne.s32.totalorder %s490, %s491
      %p500 = scmp.eq.s32.totalorder %s39, 0
      %p501 = por %p499, %p500
      %p502 = scmp.ne.s32.totalorder %s490, %s491
      %p503 = scmp.eq.s32.totalorder %s40, 1
      %p504 = por %p502, %p503
      %p506 = scmp.ne.s32.totalorder %s491, %s505
      %p507 = scmp.eq.s32.totalorder %s40, 0
      %p508 = por %p506, %p507
      %s510 = sadd.s32 %s509, 1
      %p513 = scmp.eq.s32.totalorder %s34, 1
      %p514 = scmp.ne.s32.totalorder %s509, %s511
      %p515 = scmp.eq.s32.totalorder %s34, 0
      %p516 = por %p514, %p515
      %p517 = scmp.ne.s32.totalorder %s509, %s511
      %p518 = scmp.eq.s32.totalorder %s39, 1
      %p519 = por %p517, %p518
      %p520 = scmp.ne.s32.totalorder %s511, %s512
      %p521 = scmp.eq.s32.totalorder %s39, 0
      %p522 = por %p520, %p521
      %p523 = scmp.ne.s32.totalorder %s511, %s512
      %p524 = scmp.eq.s32.totalorder %s40, 1
      %p525 = por %p523, %p524
      %p527 = scmp.ne.s32.totalorder %s512, %s526
      %p528 = scmp.eq.s32.totalorder %s40, 0
      %p529 = por %p527, %p528
      %s531 = sadd.s32 %s530, 1
      %p534 = scmp.eq.s32.totalorder %s34, 1
      %p535 = scmp.ne.s32.totalorder %s530, %s532
      %p536 = scmp.eq.s32.totalorder %s34, 0
      %p537 = por %p535, %p536
      %p538 = scmp.ne.s32.totalorder %s530, %s532
      %p539 = scmp.eq.s32.totalorder %s39, 1
      %p540 = por %p538, %p539
      %p541 = scmp.ne.s32.totalorder %s532, %s533
      %p542 = scmp.eq.s32.totalorder %s39, 0
      %p543 = por %p541, %p542
      %p544 = scmp.ne.s32.totalorder %s532, %s533
      %p545 = scmp.eq.s32.totalorder %s40, 1
      %p546 = por %p544, %p545
      %p548 = scmp.ne.s32.totalorder %s533, %s547
      %p549 = scmp.eq.s32.totalorder %s40, 0
      %p550 = por %p548, %p549
      %s552 = sadd.s32 %s551, 1
      %p555 = scmp.eq.s32.totalorder %s34, 1
      %p556 = scmp.ne.s32.totalorder %s551, %s553
      %p557 = scmp.eq.s32.totalorder %s34, 0
      %p558 = por %p556, %p557
      %p559 = scmp.ne.s32.totalorder %s551, %s553
      %p560 = scmp.eq.s32.totalorder %s39, 1
      %p561 = por %p559, %p560
      %p562 = scmp.ne.s32.totalorder %s553, %s554
      %p563 = scmp.eq.s32.totalorder %s39, 0
      %p564 = por %p562, %p563
      %p565 = scmp.ne.s32.totalorder %s553, %s554
      %p566 = scmp.eq.s32.totalorder %s40, 1
      %p567 = por %p565, %p566
      %p569 = scmp.ne.s32.totalorder %s554, %s568
      %p570 = scmp.eq.s32.totalorder %s40, 0
      %p571 = por %p569, %p570
      %s572 = ssub.s32 %s34, %s41
      %p573 = scmp.eq.s32.totalorder %s572, 0
      %s575 = sadd.s32 %s574, 1
      %s576 = scalar_select %p573, %s574, %s575
      %p579 = pneg %p573
      %p580 = scmp.eq.s32.totalorder %s34, 1
      %p581 = por %p579, %p580
      %p582 = scmp.ne.s32.totalorder %s574, %s577
      %p583 = scmp.eq.s32.totalorder %s34, 0
      %p584 = por %p582, %p583
      %p585 = scmp.ne.s32.totalorder %s574, %s577
      %p586 = scmp.eq.s32.totalorder %s39, 1
      %p587 = por %p585, %p586
      %p588 = scmp.ne.s32.totalorder %s577, %s578
      %p589 = scmp.eq.s32.totalorder %s39, 0
      %p590 = por %p588, %p589
      %p591 = scmp.ne.s32.totalorder %s577, %s578
      %p592 = scmp.eq.s32.totalorder %s40, 1
      %p593 = por %p591, %p592
      %p595 = scmp.ne.s32.totalorder %s578, %s594
      %p596 = scmp.eq.s32.totalorder %s40, 0
      %p597 = por %p595, %p596
      %p598 = scmp.le.s32.totalorder 1, %s34
      %p599 = scmp.lt.s32.totalorder %s34, 3
      %p600 = pnand %p598, %p599
      %p601 = pneg %p600
      // Predicated region
      $region9: #{resnet1d_forward.1} parent=5 // pred_check
        _
      $region10: #{resnet1d_forward.1} parent=5 // pred_check_branch
        %603 = sbr.rel (%p600) target = $region12
      $region11: #{resnet1d_forward.1} parent=5 // pred_region
        %s604 = ssub.s32 %s34, 1
        // Predicated region
        $region13: #{resnet1d_forward.1} parent=11 // pred_check
          %p605 = pneg %p81
        $region14: #{resnet1d_forward.1} parent=11 // pred_check_branch
          %607 = sbr.rel (%p605) target = $region16
        $region15: #{resnet1d_forward.1} parent=11 // pred_region
          _
        $region16: #{resnet1d_forward.1} parent=11 // pred_fallthru
          _
        // Predicated region
        $region17: #{resnet1d_forward.1} parent=11 // pred_check
          %p608 = pneg %p102
        $region18: #{resnet1d_forward.1} parent=11 // pred_check_branch
          %610 = sbr.rel (%p608) target = $region20
        $region19: #{resnet1d_forward.1} parent=11 // pred_region
          _
        $region20: #{resnet1d_forward.1} parent=11 // pred_fallthru
          _
        // Predicated region
        $region21: #{resnet1d_forward.1} parent=11 // pred_check
          %p611 = pneg %p123
        $region22: #{resnet1d_forward.1} parent=11 // pred_check_branch
          %613 = sbr.rel (%p611) target = $region24
        $region23: #{resnet1d_forward.1} parent=11 // pred_region
          _
        $region24: #{resnet1d_forward.1} parent=11 // pred_fallthru
          _
        // Predicated region
        $region25: #{resnet1d_forward.1} parent=11 // pred_check
          %p614 = pneg %p144
        $region26: #{resnet1d_forward.1} parent=11 // pred_check_branch
          %616 = sbr.rel (%p614) target = $region28
        $region27: #{resnet1d_forward.1} parent=11 // pred_region
          _
        $region28: #{resnet1d_forward.1} parent=11 // pred_fallthru
          _
        // Predicated region
        $region29: #{resnet1d_forward.1} parent=11 // pred_check
          %p617 = pneg %p165
        $region30: #{resnet1d_forward.1} parent=11 // pred_check_branch
          %619 = sbr.rel (%p617) target = $region32
        $region31: #{resnet1d_forward.1} parent=11 // pred_region
          _
        $region32: #{resnet1d_forward.1} parent=11 // pred_fallthru
          _
        // Predicated region
        $region33: #{resnet1d_forward.1} parent=11 // pred_check
          %p620 = pneg %p186
        $region34: #{resnet1d_forward.1} parent=11 // pred_check_branch
          %622 = sbr.rel (%p620) target = $region36
        $region35: #{resnet1d_forward.1} parent=11 // pred_region
          _
        $region36: #{resnet1d_forward.1} parent=11 // pred_fallthru
          _
        // Predicated region
        $region37: #{resnet1d_forward.1} parent=11 // pred_check
          %p623 = pneg %p207
        $region38: #{resnet1d_forward.1} parent=11 // pred_check_branch
          %625 = sbr.rel (%p623) target = $region40
        $region39: #{resnet1d_forward.1} parent=11 // pred_region
          _
        $region40: #{resnet1d_forward.1} parent=11 // pred_fallthru
          _
        // Predicated region
        $region41: #{resnet1d_forward.1} parent=11 // pred_check
          %p626 = pneg %p228
        $region42: #{resnet1d_forward.1} parent=11 // pred_check_branch
          %628 = sbr.rel (%p626) target = $region44
        $region43: #{resnet1d_forward.1} parent=11 // pred_region
          _
        $region44: #{resnet1d_forward.1} parent=11 // pred_fallthru
          _
        // Predicated region
        $region45: #{resnet1d_forward.1} parent=11 // pred_check
          %p629 = pneg %p249
        $region46: #{resnet1d_forward.1} parent=11 // pred_check_branch
          %631 = sbr.rel (%p629) target = $region48
        $region47: #{resnet1d_forward.1} parent=11 // pred_region
          _
        $region48: #{resnet1d_forward.1} parent=11 // pred_fallthru
          _
        // Predicated region
        $region49: #{resnet1d_forward.1} parent=11 // pred_check
          %p632 = pneg %p270
        $region50: #{resnet1d_forward.1} parent=11 // pred_check_branch
          %634 = sbr.rel (%p632) target = $region52
        $region51: #{resnet1d_forward.1} parent=11 // pred_region
          _
        $region52: #{resnet1d_forward.1} parent=11 // pred_fallthru
          _
        // Predicated region
        $region53: #{resnet1d_forward.1} parent=11 // pred_check
          %p635 = pneg %p291
        $region54: #{resnet1d_forward.1} parent=11 // pred_check_branch
          %637 = sbr.rel (%p635) target = $region56
        $region55: #{resnet1d_forward.1} parent=11 // pred_region
          _
        $region56: #{resnet1d_forward.1} parent=11 // pred_fallthru
          _
        // Predicated region
        $region57: #{resnet1d_forward.1} parent=11 // pred_check
          %p638 = pneg %p312
        $region58: #{resnet1d_forward.1} parent=11 // pred_check_branch
          %640 = sbr.rel (%p638) target = $region60
        $region59: #{resnet1d_forward.1} parent=11 // pred_region
          _
        $region60: #{resnet1d_forward.1} parent=11 // pred_fallthru
          _
        // Predicated region
        $region61: #{resnet1d_forward.1} parent=11 // pred_check
          %p641 = pneg %p333
        $region62: #{resnet1d_forward.1} parent=11 // pred_check_branch
          %643 = sbr.rel (%p641) target = $region64
        $region63: #{resnet1d_forward.1} parent=11 // pred_region
          _
        $region64: #{resnet1d_forward.1} parent=11 // pred_fallthru
          _
        // Predicated region
        $region65: #{resnet1d_forward.1} parent=11 // pred_check
          %p644 = pneg %p354
        $region66: #{resnet1d_forward.1} parent=11 // pred_check_branch
          %646 = sbr.rel (%p644) target = $region68
        $region67: #{resnet1d_forward.1} parent=11 // pred_region
          _
        $region68: #{resnet1d_forward.1} parent=11 // pred_fallthru
          _
        // Predicated region
        $region69: #{resnet1d_forward.1} parent=11 // pred_check
          %p647 = pneg %p375
        $region70: #{resnet1d_forward.1} parent=11 // pred_check_branch
          %649 = sbr.rel (%p647) target = $region72
        $region71: #{resnet1d_forward.1} parent=11 // pred_region
          _
        $region72: #{resnet1d_forward.1} parent=11 // pred_fallthru
          _
        // Predicated region
        $region73: #{resnet1d_forward.1} parent=11 // pred_check
          %p650 = pneg %p396
        $region74: #{resnet1d_forward.1} parent=11 // pred_check_branch
          %652 = sbr.rel (%p650) target = $region76
        $region75: #{resnet1d_forward.1} parent=11 // pred_region
          _
        $region76: #{resnet1d_forward.1} parent=11 // pred_fallthru
          _
        // Predicated region
        $region77: #{resnet1d_forward.1} parent=11 // pred_check
          %p653 = pneg %p417
        $region78: #{resnet1d_forward.1} parent=11 // pred_check_branch
          %655 = sbr.rel (%p653) target = $region80
        $region79: #{resnet1d_forward.1} parent=11 // pred_region
          _
        $region80: #{resnet1d_forward.1} parent=11 // pred_fallthru
          _
        // Predicated region
        $region81: #{resnet1d_forward.1} parent=11 // pred_check
          %p656 = pneg %p438
        $region82: #{resnet1d_forward.1} parent=11 // pred_check_branch
          %658 = sbr.rel (%p656) target = $region84
        $region83: #{resnet1d_forward.1} parent=11 // pred_region
          _
        $region84: #{resnet1d_forward.1} parent=11 // pred_fallthru
          _
        // Predicated region
        $region85: #{resnet1d_forward.1} parent=11 // pred_check
          %p659 = pneg %p459
        $region86: #{resnet1d_forward.1} parent=11 // pred_check_branch
          %661 = sbr.rel (%p659) target = $region88
        $region87: #{resnet1d_forward.1} parent=11 // pred_region
          _
        $region88: #{resnet1d_forward.1} parent=11 // pred_fallthru
          _
        // Predicated region
        $region89: #{resnet1d_forward.1} parent=11 // pred_check
          %p662 = pneg %p480
        $region90: #{resnet1d_forward.1} parent=11 // pred_check_branch
          %664 = sbr.rel (%p662) target = $region92
        $region91: #{resnet1d_forward.1} parent=11 // pred_region
          _
        $region92: #{resnet1d_forward.1} parent=11 // pred_fallthru
          _
        // Predicated region
        $region93: #{resnet1d_forward.1} parent=11 // pred_check
          %p665 = pneg %p501
        $region94: #{resnet1d_forward.1} parent=11 // pred_check_branch
          %667 = sbr.rel (%p665) target = $region96
        $region95: #{resnet1d_forward.1} parent=11 // pred_region
          _
        $region96: #{resnet1d_forward.1} parent=11 // pred_fallthru
          _
        // Predicated region
        $region97: #{resnet1d_forward.1} parent=11 // pred_check
          %p668 = pneg %p522
        $region98: #{resnet1d_forward.1} parent=11 // pred_check_branch
          %670 = sbr.rel (%p668) target = $region100
        $region99: #{resnet1d_forward.1} parent=11 // pred_region
          _
        $region100: #{resnet1d_forward.1} parent=11 // pred_fallthru
          _
        // Predicated region
        $region101: #{resnet1d_forward.1} parent=11 // pred_check
          %p671 = pneg %p543
        $region102: #{resnet1d_forward.1} parent=11 // pred_check_branch
          %673 = sbr.rel (%p671) target = $region104
        $region103: #{resnet1d_forward.1} parent=11 // pred_region
          _
        $region104: #{resnet1d_forward.1} parent=11 // pred_fallthru
          _
        // Predicated region
        $region105: #{resnet1d_forward.1} parent=11 // pred_check
          %p674 = pneg %p564
        $region106: #{resnet1d_forward.1} parent=11 // pred_check_branch
          %676 = sbr.rel (%p674) target = $region108
        $region107: #{resnet1d_forward.1} parent=11 // pred_region
          _
        $region108: #{resnet1d_forward.1} parent=11 // pred_fallthru
          _
      $region12: #{resnet1d_forward.1} parent=5 // pred_fallthru
        _
      %p677 = scmp.lt.s32.totalorder %s34, 2
      // Predicated region
      $region109: #{resnet1d_forward.1} parent=5 // pred_check
        %p678 = pneg %p677
      $region110: #{resnet1d_forward.1} parent=5 // pred_check_branch
        %680 = sbr.rel (%p678) target = $region112
      $region111: #{resnet1d_forward.1} parent=5 // pred_region
        // Predicated region
        $region113: #{resnet1d_forward.1} parent=111 // pred_check
          %p681 = pneg %p54
        $region114: #{resnet1d_forward.1} parent=111 // pred_check_branch
          %683 = sbr.rel (%p681) target = $region116
        $region115: #{resnet1d_forward.1} parent=111 // pred_region
          %p684 = scmp.lt.s32.totalorder %s34, 1
          %s685 = scalar_select %p684, %s34, 1
          %s686 = smul.addr %s685, 8
          %s687 = scalar_lea.vmem %s0, %s686
        $region116: #{resnet1d_forward.1} parent=111 // pred_fallthru
          _
      $region112: #{resnet1d_forward.1} parent=5 // pred_fallthru
        _
      %p688 = scmp.le.s32.totalorder 1, %s34
      %p689 = scmp.lt.s32.totalorder %s34, 3
      %p690 = pnand %p688, %p689
      %p691 = pneg %p690
      // Predicated region
      $region117: #{resnet1d_forward.1} parent=5 // pred_check
        _
      $region118: #{resnet1d_forward.1} parent=5 // pred_check_branch
        %693 = sbr.rel (%p690) target = $region120
      $region119: #{resnet1d_forward.1} parent=5 // pred_region
        %s694 = ssub.s32 %s34, 1
        %p695 = scmp.lt.s32.totalorder %s39, 1
        %s696 = scalar_select %p695, %s39, 1
        %s697 = smul.addr %s696, 8
        %s698 = scalar_lea.vmem %s0, %s697
        %p699 = pneg %p60
        %p700 = pneg %p57
        %p701 = pneg %p81
        %p702 = pneg %p78
        %p703 = pneg %p102
        %p704 = pneg %p99
        %p705 = pneg %p123
        %p706 = pneg %p120
        %p707 = pneg %p144
        %p708 = pneg %p141
        %p709 = pneg %p165
        %p710 = pneg %p162
        %p711 = pneg %p186
        %p712 = pneg %p183
        %p713 = pneg %p207
        %p714 = pneg %p204
        %p715 = pneg %p228
        %p716 = pneg %p225
        %p717 = pneg %p249
        %p718 = pneg %p246
        %p719 = pneg %p270
        %p720 = pneg %p267
        %p721 = pneg %p291
        %p722 = pneg %p288
        %p723 = pneg %p312
        %p724 = pneg %p309
        %p725 = pneg %p333
        %p726 = pneg %p330
        %p727 = pneg %p354
        %p728 = pneg %p351
        %p729 = pneg %p375
        %p730 = pneg %p372
        %p731 = pneg %p396
        %p732 = pneg %p393
        %p733 = pneg %p417
        %p734 = pneg %p414
        %p735 = pneg %p438
        %p736 = pneg %p435
        %p737 = pneg %p459
        %p738 = pneg %p456
        %p739 = pneg %p480
        %p740 = pneg %p477
        %p741 = pneg %p501
        %p742 = pneg %p498
        %p743 = pneg %p522
        %p744 = pneg %p519
        %p745 = pneg %p543
        %p746 = pneg %p540
        %p747 = pneg %p564
        %p748 = pneg %p561
        %p749 = pneg %p590
        %p750 = pneg %p587
        %s751 = sand.u32 %s577, 1
        %s752 = scalar_lea.sflag [#allocation3], %s751
        %s753 = sand.u32 %s577, 1
        %s754 = smul.addr %s753, 8
        %s755 = scalar_lea.vmem [#allocation2], %s754
        %p756 = scmp.lt.s32.totalorder %s39, 1
        %s757 = scalar_select %p756, %s39, 1
        %s758 = smul.addr %s757, 8
        %s759 = scalar_lea.vmem %s0, %s758
        %v760 = vlaneseq
        %v761 = vand.u32 %v760, 127
        %vm762 = vcmp.ge.s32.totalorder %v761, 1
        %vm763 = vcmp.le.s32.totalorder %v761, 126
        %v764 = vld [vmem:[%s759] sm:$0xff]
        %765 = vrot.lane.b32.xlu0 %v764, 1
        %v766 = vpop.permute.xlu0 %765
        %v767 = vsel %vm762, 1, 0
        %vm768 = vcmp.eq.s32.totalorder %v767, 1
        %v769 = vsel %vm768, %v766, 0.0
        %770 = vrot.lane.b32.xlu0 %v764, 127
        %v771 = vpop.permute.xlu0 %770
        %v772 = vsel %vm763, 1, 0
        %vm773 = vcmp.eq.s32.totalorder %v772, 1
        %v774 = vsel %vm773, %v771, 0.0
        %v775 = vld [vmem:[%s1] sm:$0xff]
        %v776 = vld [vmem:[%s2] sm:$0xff]
        %778 = vset.pattern.permute.xlu0 0
        %779 = vperm.xlu0 %778, %v776
        %v780 = vpop.permute.xlu0 %779
        %vm782 = vcmask 195584
        %v784 = vsel %vm782, %v775, 0
        %786 = vmatprep.subr.mxu0 0.0
        %787 = vmatpush1.msra.mxu0 0.0
        %788 = vmatprep.subr.mxu0 0.0
        %789 = vmatpush1.msra.mxu0 0.0
        %790 = vmatprep.subr.mxu0 0.0
        %791 = vmatpush1.msra.mxu0 0.0
        %792 = vmatprep.subr.mxu0 0.0
        %793 = vmatpush1.msra.mxu0 0.0
        %794 = vmatprep.subr.mxu0 0.0
        %795 = vmatpush1.msra.mxu0 0.0
        %796 = vmatprep.subr.mxu0 0.0
        %797 = vmatpush1.msra.mxu0 0.0
        %798 = vmatprep.subr.mxu0 0.0
        %799 = vmatpush1.msra.mxu0 0.0
        %800 = vmatprep.subr.mxu0 0.0
        %801 = vmatpush1.msra.mxu0 0.0
        %802 = vmatprep.subr.mxu0 0.0
        %803 = vmatpush1.msra.mxu0 0.0
        %804 = vmatprep.subr.mxu0 0.0
        %805 = vmatpush1.msra.mxu0 0.0
        %806 = vmatprep.subr.mxu0 0.0
        %807 = vmatpush1.msra.mxu0 0.0
        %808 = vmatprep.subr.mxu0 0.0
        %809 = vmatpush1.msra.mxu0 0.0
        %810 = vmatprep.subr.mxu0 0.0
        %811 = vmatpush1.msra.mxu0 0.0
        %812 = vmatprep.subr.mxu0 0.0
        %813 = vmatpush1.msra.mxu0 %v774
        %814 = vmatprep.subr.mxu0 0.0
        %815 = vmatpush1.msra.mxu0 %v764
        %816 = vmatprep.subr.mxu0 0.0
        %817 = vmatpush1.msra.mxu0 %v769
        %818 = vmatprep.subr.mxu0 0.0
        %819 = vmatpush2.msra.mxu0 0.0
        %820 = vmatprep.subr.mxu0 0.0
        %821 = vmatpush2.msra.mxu0 0.0
        %822 = vmatprep.subr.mxu0 0.0
        %823 = vmatpush2.msra.mxu0 0.0
        %824 = vmatprep.subr.mxu0 0.0
        %825 = vmatpush2.msra.mxu0 0.0
        %826 = vmatprep.subr.mxu0 0.0
        %827 = vmatpush2.msra.mxu0 0.0
        %828 = vmatprep.subr.mxu0 0.0
        %829 = vmatpush2.msra.mxu0 0.0
        %830 = vmatprep.subr.mxu0 0.0
        %831 = vmatpush2.msra.mxu0 0.0
        %832 = vmatprep.subr.mxu0 0.0
        %833 = vmatpush2.msra.mxu0 0.0
        %834 = vmatprep.subr.mxu0 0.0
        %835 = vmatpush2.msra.mxu0 0.0
        %836 = vmatprep.subr.mxu0 0.0
        %837 = vmatpush2.msra.mxu0 0.0
        %838 = vmatprep.subr.mxu0 0.0
        %839 = vmatpush2.msra.mxu0 0.0
        %840 = vmatprep.subr.mxu0 0.0
        %841 = vmatpush2.msra.mxu0 0.0
        %842 = vmatprep.subr.mxu0 0.0
        %843 = vmatpush2.msra.mxu0 0.0
        %844 = vmatprep.subr.mxu0 0.0
        %845 = vmatpush2.msra.mxu0 0.0
        %846 = vmatprep.subr.mxu0 0.0
        %847 = vmatpush2.msra.mxu0 0.0
        %848 = vmatprep.subr.mxu0 0.0
        %849 = vmatpush2.msra.mxu0 0.0
        %850 = vmatprep.mubr.f32.mxu0 0.0
        %851 = vmatmul.mubr.f32.gmra.mxu0 %v784
        %v852 = vpop.f32.mrf.mxu0
        %v853 = vadd.f32 %v780, %v852
        %v854 = vpop.f32.mrf.mxu0
        %855 = vdwg.mxu0
        %v856 = vmax.f32 %v853, 0.0
        %857 = vrot.lane.b32.xlu0 %v856, 1
        %v858 = vpop.permute.xlu0 %857
        %v859 = vsel %vm768, %v858, 0.0
        %860 = vrot.lane.b32.xlu0 %v856, 127
        %v861 = vpop.permute.xlu0 %860
        %v862 = vsel %vm773, %v861, 0.0
        %v863 = vld [vmem:[%s3] sm:$0xff]
        %v864 = vld [vmem:[%s3 + $0x8] sm:$0xff]
        %v865 = vld [vmem:[%s4] sm:$0xff]
        %v866 = vld [vmem:[%s4 + $0x8] sm:$0xff]
        %868 = vset.pattern.permute.xlu0 0
        %869 = vperm.xlu0 %868, %v865
        %v870 = vpop.permute.xlu0 %869
        %873 = vset.pattern.permute.xlu0 0
        %874 = vperm.xlu0 %873, %v866
        %v875 = vpop.permute.xlu0 %874
        %v878 = vsel %vm782, %v863, 0
        %v881 = vsel %vm782, %v864, 0
        %883 = vmatprep.subr.mxu0 0.0
        %884 = vmatpush1.msra.mxu0 0.0
        %885 = vmatprep.subr.mxu0 0.0
        %886 = vmatpush1.msra.mxu0 0.0
        %887 = vmatprep.subr.mxu0 0.0
        %888 = vmatpush1.msra.mxu0 0.0
        %889 = vmatprep.subr.mxu0 0.0
        %890 = vmatpush1.msra.mxu0 0.0
        %891 = vmatprep.subr.mxu0 0.0
        %892 = vmatpush1.msra.mxu0 0.0
        %893 = vmatprep.subr.mxu0 0.0
        %894 = vmatpush1.msra.mxu0 0.0
        %895 = vmatprep.subr.mxu0 0.0
        %896 = vmatpush1.msra.mxu0 0.0
        %897 = vmatprep.subr.mxu0 0.0
        %898 = vmatpush1.msra.mxu0 0.0
        %899 = vmatprep.subr.mxu0 0.0
        %900 = vmatpush1.msra.mxu0 0.0
        %901 = vmatprep.subr.mxu0 0.0
        %902 = vmatpush1.msra.mxu0 0.0
        %903 = vmatprep.subr.mxu0 0.0
        %904 = vmatpush1.msra.mxu0 0.0
        %905 = vmatprep.subr.mxu0 0.0
        %906 = vmatpush1.msra.mxu0 0.0
        %907 = vmatprep.subr.mxu0 0.0
        %908 = vmatpush1.msra.mxu0 0.0
        %909 = vmatprep.subr.mxu0 0.0
        %910 = vmatpush1.msra.mxu0 %v862
        %911 = vmatprep.subr.mxu0 0.0
        %912 = vmatpush1.msra.mxu0 %v856
        %913 = vmatprep.subr.mxu0 0.0
        %914 = vmatpush1.msra.mxu0 %v859
        %915 = vmatprep.subr.mxu0 0.0
        %916 = vmatpush2.msra.mxu0 0.0
        %917 = vmatprep.subr.mxu0 0.0
        %918 = vmatpush2.msra.mxu0 0.0
        %919 = vmatprep.subr.mxu0 0.0
        %920 = vmatpush2.msra.mxu0 0.0
        %921 = vmatprep.subr.mxu0 0.0
        %922 = vmatpush2.msra.mxu0 0.0
        %923 = vmatprep.subr.mxu0 0.0
        %924 = vmatpush2.msra.mxu0 0.0
        %925 = vmatprep.subr.mxu0 0.0
        %926 = vmatpush2.msra.mxu0 0.0
        %927 = vmatprep.subr.mxu0 0.0
        %928 = vmatpush2.msra.mxu0 0.0
        %929 = vmatprep.subr.mxu0 0.0
        %930 = vmatpush2.msra.mxu0 0.0
        %931 = vmatprep.subr.mxu0 0.0
        %932 = vmatpush2.msra.mxu0 0.0
        %933 = vmatprep.subr.mxu0 0.0
        %934 = vmatpush2.msra.mxu0 0.0
        %935 = vmatprep.subr.mxu0 0.0
        %936 = vmatpush2.msra.mxu0 0.0
        %937 = vmatprep.subr.mxu0 0.0
        %938 = vmatpush2.msra.mxu0 0.0
        %939 = vmatprep.subr.mxu0 0.0
        %940 = vmatpush2.msra.mxu0 0.0
        %941 = vmatprep.subr.mxu0 0.0
        %942 = vmatpush2.msra.mxu0 0.0
        %943 = vmatprep.subr.mxu0 0.0
        %944 = vmatpush2.msra.mxu0 0.0
        %945 = vmatprep.subr.mxu0 0.0
        %946 = vmatpush2.msra.mxu0 0.0
        %947 = vmatprep.mubr.f32.mxu0 0.0
        %948 = vmatmul.mubr.f32.gmra.mxu0 %v878
        %v949 = vpop.f32.mrf.mxu0
        %v950 = vadd.f32 %v870, %v949
        %v951 = vpop.f32.mrf.mxu0
        %952 = vmatprep.mubr.f32.mxu0 0.0
        %953 = vmatmul.mubr.f32.gmra.mxu0 %v881
        %v954 = vpop.f32.mrf.mxu0
        %v955 = vadd.f32 %v875, %v954
        %v956 = vpop.f32.mrf.mxu0
        %957 = vdwg.mxu0
        %v958 = vmax.f32 %v950, 0.0
        %v959 = vmax.f32 %v955, 0.0
        %960 = vrot.lane.b32.xlu0 %v958, 1
        %v961 = vpop.permute.xlu0 %960
        %962 = vrot.lane.b32.xlu0 %v959, 1
        %v963 = vpop.permute.xlu0 %962
        %v964 = vsel %vm768, %v961, 0.0
        %v965 = vsel %vm768, %v963, 0.0
        %966 = vrot.lane.b32.xlu0 %v958, 127
        %v967 = vpop.permute.xlu0 %966
        %968 = vrot.lane.b32.xlu0 %v959, 127
        %v969 = vpop.permute.xlu0 %968
        %v970 = vsel %vm773, %v967, 0.0
        %v971 = vsel %vm773, %v969, 0.0
        %v972 = vld [vmem:[%s5] sm:$0xff]
        %v973 = vld [vmem:[%s5 + $0x8] sm:$0xff]
        %v974 = vld [vmem:[%s6] sm:$0xff]
        %v975 = vld [vmem:[%s6 + $0x8] sm:$0xff]
        %977 = vset.pattern.permute.xlu0 0
        %978 = vperm.xlu0 %977, %v974
        %v979 = vpop.permute.xlu0 %978
        %982 = vset.pattern.permute.xlu0 0
        %983 = vperm.xlu0 %982, %v975
        %v984 = vpop.permute.xlu0 %983
        %vm986 = vcmask 392192
        %v988 = vsel %vm986, %v972, 0
        %v991 = vsel %vm986, %v973, 0
        %993 = vmatprep.subr.mxu0 0.0
        %994 = vmatpush1.msra.mxu0 0.0
        %995 = vmatprep.subr.mxu0 0.0
        %996 = vmatpush1.msra.mxu0 0.0
        %997 = vmatprep.subr.mxu0 0.0
        %998 = vmatpush1.msra.mxu0 0.0
        %999 = vmatprep.subr.mxu0 0.0
        %1000 = vmatpush1.msra.mxu0 0.0
        %1001 = vmatprep.subr.mxu0 0.0
        %1002 = vmatpush1.msra.mxu0 0.0
        %1003 = vmatprep.subr.mxu0 0.0
        %1004 = vmatpush1.msra.mxu0 0.0
        %1005 = vmatprep.subr.mxu0 0.0
        %1006 = vmatpush1.msra.mxu0 0.0
        %1007 = vmatprep.subr.mxu0 0.0
        %1008 = vmatpush1.msra.mxu0 0.0
        %1009 = vmatprep.subr.mxu0 0.0
        %1010 = vmatpush1.msra.mxu0 0.0
        %1011 = vmatprep.subr.mxu0 0.0
        %1012 = vmatpush1.msra.mxu0 0.0
        %1013 = vmatprep.subr.mxu0 0.0
        %1014 = vmatpush1.msra.mxu0 %v971
        %1015 = vmatprep.subr.mxu0 0.0
        %1016 = vmatpush1.msra.mxu0 %v970
        %1017 = vmatprep.subr.mxu0 0.0
        %1018 = vmatpush1.msra.mxu0 %v959
        %1019 = vmatprep.subr.mxu0 0.0
        %1020 = vmatpush1.msra.mxu0 %v958
        %1021 = vmatprep.subr.mxu0 0.0
        %1022 = vmatpush1.msra.mxu0 %v965
        %1023 = vmatprep.subr.mxu0 0.0
        %1024 = vmatpush1.msra.mxu0 %v964
        %1025 = vmatprep.subr.mxu0 0.0
        %1026 = vmatpush2.msra.mxu0 0.0
        %1027 = vmatprep.subr.mxu0 0.0
        %1028 = vmatpush2.msra.mxu0 0.0
        %1029 = vmatprep.subr.mxu0 0.0
        %1030 = vmatpush2.msra.mxu0 0.0
        %1031 = vmatprep.subr.mxu0 0.0
        %1032 = vmatpush2.msra.mxu0 0.0
        %1033 = vmatprep.subr.mxu0 0.0
        %1034 = vmatpush2.msra.mxu0 0.0
        %1035 = vmatprep.subr.mxu0 0.0
        %1036 = vmatpush2.msra.mxu0 0.0
        %1037 = vmatprep.subr.mxu0 0.0
        %1038 = vmatpush2.msra.mxu0 0.0
        %1039 = vmatprep.subr.mxu0 0.0
        %1040 = vmatpush2.msra.mxu0 0.0
        %1041 = vmatprep.subr.mxu0 0.0
        %1042 = vmatpush2.msra.mxu0 0.0
        %1043 = vmatprep.subr.mxu0 0.0
        %1044 = vmatpush2.msra.mxu0 0.0
        %1045 = vmatprep.subr.mxu0 0.0
        %1046 = vmatpush2.msra.mxu0 0.0
        %1047 = vmatprep.subr.mxu0 0.0
        %1048 = vmatpush2.msra.mxu0 0.0
        %1049 = vmatprep.subr.mxu0 0.0
        %1050 = vmatpush2.msra.mxu0 0.0
        %1051 = vmatprep.subr.mxu0 0.0
        %1052 = vmatpush2.msra.mxu0 0.0
        %1053 = vmatprep.subr.mxu0 0.0
        %1054 = vmatpush2.msra.mxu0 0.0
        %1055 = vmatprep.subr.mxu0 0.0
        %1056 = vmatpush2.msra.mxu0 0.0
        %1057 = vmatprep.mubr.f32.mxu0 0.0
        %1058 = vmatmul.mubr.f32.gmra.mxu0 %v988
        %v1059 = vpop.f32.mrf.mxu0
        %v1060 = vadd.f32 %v979, %v1059
        %v1061 = vpop.f32.mrf.mxu0
        %1062 = vmatprep.mubr.f32.mxu0 0.0
        %1063 = vmatmul.mubr.f32.gmra.mxu0 %v991
        %v1064 = vpop.f32.mrf.mxu0
        %v1065 = vadd.f32 %v984, %v1064
        %v1066 = vpop.f32.mrf.mxu0
        %1067 = vdwg.mxu0
        %v1068 = vld [vmem:[%s7] sm:$0xff]
        %v1069 = vld [vmem:[%s7 + $0x8] sm:$0xff]
        %v1070 = vld [vmem:[%s8] sm:$0xff]
        %v1071 = vld [vmem:[%s8 + $0x8] sm:$0xff]
        %1073 = vset.pattern.permute.xlu0 0
        %1074 = vperm.xlu0 %1073, %v1070
        %v1075 = vpop.permute.xlu0 %1074
        %1078 = vset.pattern.permute.xlu0 0
        %1079 = vperm.xlu0 %1078, %v1071
        %v1080 = vpop.permute.xlu0 %1079
        %vm1082 = vcmask 64512
        %v1084 = vsel %vm1082, %v1068, 0
        %v1087 = vsel %vm1082, %v1069, 0
        %1089 = vmatprep.subr.mxu0 0.0
        %1090 = vmatpush1.msra.mxu0 0.0
        %1091 = vmatprep.subr.mxu0 0.0
        %1092 = vmatpush1.msra.mxu0 0.0
        %1093 = vmatprep.subr.mxu0 0.0
        %1094 = vmatpush1.msra.mxu0 0.0
        %1095 = vmatprep.subr.mxu0 0.0
        %1096 = vmatpush1.msra.mxu0 0.0
        %1097 = vmatprep.subr.mxu0 0.0
        %1098 = vmatpush1.msra.mxu0 0.0
        %1099 = vmatprep.subr.mxu0 0.0
        %1100 = vmatpush1.msra.mxu0 0.0
        %1101 = vmatprep.subr.mxu0 0.0
        %1102 = vmatpush1.msra.mxu0 0.0
        %1103 = vmatprep.subr.mxu0 0.0
        %1104 = vmatpush1.msra.mxu0 0.0
        %1105 = vmatprep.subr.mxu0 0.0
        %1106 = vmatpush1.msra.mxu0 0.0
        %1107 = vmatprep.subr.mxu0 0.0
        %1108 = vmatpush1.msra.mxu0 0.0
        %1109 = vmatprep.subr.mxu0 0.0
        %1110 = vmatpush1.msra.mxu0 0.0
        %1111 = vmatprep.subr.mxu0 0.0
        %1112 = vmatpush1.msra.mxu0 0.0
        %1113 = vmatprep.subr.mxu0 0.0
        %1114 = vmatpush1.msra.mxu0 0.0
        %1115 = vmatprep.subr.mxu0 0.0
        %1116 = vmatpush1.msra.mxu0 0.0
        %1117 = vmatprep.subr.mxu0 0.0
        %1118 = vmatpush1.msra.mxu0 0.0
        %1119 = vmatprep.subr.mxu0 0.0
        %1120 = vmatpush1.msra.mxu0 %v856
        %1121 = vmatprep.subr.mxu0 0.0
        %1122 = vmatpush2.msra.mxu0 0.0
        %1123 = vmatprep.subr.mxu0 0.0
        %1124 = vmatpush2.msra.mxu0 0.0
        %1125 = vmatprep.subr.mxu0 0.0
        %1126 = vmatpush2.msra.mxu0 0.0
        %1127 = vmatprep.subr.mxu0 0.0
        %1128 = vmatpush2.msra.mxu0 0.0
        %1129 = vmatprep.subr.mxu0 0.0
        %1130 = vmatpush2.msra.mxu0 0.0
        %1131 = vmatprep.subr.mxu0 0.0
        %1132 = vmatpush2.msra.mxu0 0.0
        %1133 = vmatprep.subr.mxu0 0.0
        %1134 = vmatpush2.msra.mxu0 0.0
        %1135 = vmatprep.subr.mxu0 0.0
        %1136 = vmatpush2.msra.mxu0 0.0
        %1137 = vmatprep.subr.mxu0 0.0
        %1138 = vmatpush2.msra.mxu0 0.0
        %1139 = vmatprep.subr.mxu0 0.0
        %1140 = vmatpush2.msra.mxu0 0.0
        %1141 = vmatprep.subr.mxu0 0.0
        %1142 = vmatpush2.msra.mxu0 0.0
        %1143 = vmatprep.subr.mxu0 0.0
        %1144 = vmatpush2.msra.mxu0 0.0
        %1145 = vmatprep.subr.mxu0 0.0
        %1146 = vmatpush2.msra.mxu0 0.0
        %1147 = vmatprep.subr.mxu0 0.0
        %1148 = vmatpush2.msra.mxu0 0.0
        %1149 = vmatprep.subr.mxu0 0.0
        %1150 = vmatpush2.msra.mxu0 0.0
        %1151 = vmatprep.subr.mxu0 0.0
        %1152 = vmatpush2.msra.mxu0 0.0
        %1153 = vmatprep.mubr.f32.mxu0 0.0
        %1154 = vmatmul.mubr.f32.gmra.mxu0 %v1084
        %v1155 = vpop.f32.mrf.mxu0
        %v1156 = vadd.f32 %v1075, %v1155
        %v1157 = vpop.f32.mrf.mxu0
        %1158 = vmatprep.mubr.f32.mxu0 0.0
        %1159 = vmatmul.mubr.f32.gmra.mxu0 %v1087
        %v1160 = vpop.f32.mrf.mxu0
        %v1161 = vadd.f32 %v1080, %v1160
        %v1162 = vpop.f32.mrf.mxu0
        %1163 = vdwg.mxu0
        %v1164 = vadd.f32 %v1060, %v1156
        %v1165 = vadd.f32 %v1065, %v1161
        %v1166 = vmax.f32 %v1164, 0.0
        %v1167 = vmax.f32 %v1165, 0.0
        %1168 = vrot.lane.b32.xlu0 %v1166, 1
        %v1169 = vpop.permute.xlu0 %1168
        %1170 = vrot.lane.b32.xlu0 %v1167, 1
        %v1171 = vpop.permute.xlu0 %1170
        %v1172 = vsel %vm768, %v1169, 0.0
        %v1173 = vsel %vm768, %v1171, 0.0
        %1174 = vrot.lane.b32.xlu0 %v1166, 127
        %v1175 = vpop.permute.xlu0 %1174
        %1176 = vrot.lane.b32.xlu0 %v1167, 127
        %v1177 = vpop.permute.xlu0 %1176
        %v1178 = vsel %vm773, %v1175, 0.0
        %v1179 = vsel %vm773, %v1177, 0.0
        %v1180 = vld [vmem:[%s9] sm:$0xff]
        %v1181 = vld [vmem:[%s9 + $0x8] sm:$0xff]
        %v1182 = vld [vmem:[%s10] sm:$0xff]
        %v1183 = vld [vmem:[%s10 + $0x8] sm:$0xff]
        %1185 = vset.pattern.permute.xlu0 0
        %1186 = vperm.xlu0 %1185, %v1182
        %v1187 = vpop.permute.xlu0 %1186
        %1190 = vset.pattern.permute.xlu0 0
        %1191 = vperm.xlu0 %1190, %v1183
        %v1192 = vpop.permute.xlu0 %1191
        %v1195 = vsel %vm986, %v1180, 0
        %v1198 = vsel %vm986, %v1181, 0
        %1200 = vmatprep.subr.mxu0 0.0
        %1201 = vmatpush1.msra.mxu0 0.0
        %1202 = vmatprep.subr.mxu0 0.0
        %1203 = vmatpush1.msra.mxu0 0.0
        %1204 = vmatprep.subr.mxu0 0.0
        %1205 = vmatpush1.msra.mxu0 0.0
        %1206 = vmatprep.subr.mxu0 0.0
        %1207 = vmatpush1.msra.mxu0 0.0
        %1208 = vmatprep.subr.mxu0 0.0
        %1209 = vmatpush1.msra.mxu0 0.0
        %1210 = vmatprep.subr.mxu0 0.0
        %1211 = vmatpush1.msra.mxu0 0.0
        %1212 = vmatprep.subr.mxu0 0.0
        %1213 = vmatpush1.msra.mxu0 0.0
        %1214 = vmatprep.subr.mxu0 0.0
        %1215 = vmatpush1.msra.mxu0 0.0
        %1216 = vmatprep.subr.mxu0 0.0
        %1217 = vmatpush1.msra.mxu0 0.0
        %1218 = vmatprep.subr.mxu0 0.0
        %1219 = vmatpush1.msra.mxu0 0.0
        %1220 = vmatprep.subr.mxu0 0.0
        %1221 = vmatpush1.msra.mxu0 %v1179
        %1222 = vmatprep.subr.mxu0 0.0
        %1223 = vmatpush1.msra.mxu0 %v1178
        %1224 = vmatprep.subr.mxu0 0.0
        %1225 = vmatpush1.msra.mxu0 %v1167
        %1226 = vmatprep.subr.mxu0 0.0
        %1227 = vmatpush1.msra.mxu0 %v1166
        %1228 = vmatprep.subr.mxu0 0.0
        %1229 = vmatpush1.msra.mxu0 %v1173
        %1230 = vmatprep.subr.mxu0 0.0
        %1231 = vmatpush1.msra.mxu0 %v1172
        %1232 = vmatprep.subr.mxu0 0.0
        %1233 = vmatpush2.msra.mxu0 0.0
        %1234 = vmatprep.subr.mxu0 0.0
        %1235 = vmatpush2.msra.mxu0 0.0
        %1236 = vmatprep.subr.mxu0 0.0
        %1237 = vmatpush2.msra.mxu0 0.0
        %1238 = vmatprep.subr.mxu0 0.0
        %1239 = vmatpush2.msra.mxu0 0.0
        %1240 = vmatprep.subr.mxu0 0.0
        %1241 = vmatpush2.msra.mxu0 0.0
        %1242 = vmatprep.subr.mxu0 0.0
        %1243 = vmatpush2.msra.mxu0 0.0
        %1244 = vmatprep.subr.mxu0 0.0
        %1245 = vmatpush2.msra.mxu0 0.0
        %1246 = vmatprep.subr.mxu0 0.0
        %1247 = vmatpush2.msra.mxu0 0.0
        %1248 = vmatprep.subr.mxu0 0.0
        %1249 = vmatpush2.msra.mxu0 0.0
        %1250 = vmatprep.subr.mxu0 0.0
        %1251 = vmatpush2.msra.mxu0 0.0
        %1252 = vmatprep.subr.mxu0 0.0
        %1253 = vmatpush2.msra.mxu0 0.0
        %1254 = vmatprep.subr.mxu0 0.0
        %1255 = vmatpush2.msra.mxu0 0.0
        %1256 = vmatprep.subr.mxu0 0.0
        %1257 = vmatpush2.msra.mxu0 0.0
        %1258 = vmatprep.subr.mxu0 0.0
        %1259 = vmatpush2.msra.mxu0 0.0
        %1260 = vmatprep.subr.mxu0 0.0
        %1261 = vmatpush2.msra.mxu0 0.0
        %1262 = vmatprep.subr.mxu0 0.0
        %1263 = vmatpush2.msra.mxu0 0.0
        %1264 = vmatprep.mubr.f32.mxu0 0.0
        %1265 = vmatmul.mubr.f32.gmra.mxu0 %v1195
        %v1266 = vpop.f32.mrf.mxu0
        %v1267 = vadd.f32 %v1187, %v1266
        %v1268 = vpop.f32.mrf.mxu0
        %1269 = vmatprep.mubr.f32.mxu0 0.0
        %1270 = vmatmul.mubr.f32.gmra.mxu0 %v1198
        %v1271 = vpop.f32.mrf.mxu0
        %v1272 = vadd.f32 %v1192, %v1271
        %v1273 = vpop.f32.mrf.mxu0
        %1274 = vdwg.mxu0
        %v1275 = vmax.f32 %v1267, 0.0
        %v1276 = vmax.f32 %v1272, 0.0
        %1277 = vrot.lane.b32.xlu0 %v1275, 1
        %v1278 = vpop.permute.xlu0 %1277
        %1279 = vrot.lane.b32.xlu0 %v1276, 1
        %v1280 = vpop.permute.xlu0 %1279
        %v1281 = vsel %vm768, %v1278, 0.0
        %v1282 = vsel %vm768, %v1280, 0.0
        %1283 = vrot.lane.b32.xlu0 %v1275, 127
        %v1284 = vpop.permute.xlu0 %1283
        %1285 = vrot.lane.b32.xlu0 %v1276, 127
        %v1286 = vpop.permute.xlu0 %1285
        %v1287 = vsel %vm773, %v1284, 0.0
        %v1288 = vsel %vm773, %v1286, 0.0
        %v1289 = vld [vmem:[%s11] sm:$0xff]
        %v1290 = vld [vmem:[%s11 + $0x8] sm:$0xff]
        %v1291 = vld [vmem:[%s12] sm:$0xff]
        %v1292 = vld [vmem:[%s12 + $0x8] sm:$0xff]
        %1294 = vset.pattern.permute.xlu0 0
        %1295 = vperm.xlu0 %1294, %v1291
        %v1296 = vpop.permute.xlu0 %1295
        %1299 = vset.pattern.permute.xlu0 0
        %1300 = vperm.xlu0 %1299, %v1292
        %v1301 = vpop.permute.xlu0 %1300
        %v1304 = vsel %vm986, %v1289, 0
        %v1307 = vsel %vm986, %v1290, 0
        %1309 = vmatprep.subr.mxu0 0.0
        %1310 = vmatpush1.msra.mxu0 0.0
        %1311 = vmatprep.subr.mxu0 0.0
        %1312 = vmatpush1.msra.mxu0 0.0
        %1313 = vmatprep.subr.mxu0 0.0
        %1314 = vmatpush1.msra.mxu0 0.0
        %1315 = vmatprep.subr.mxu0 0.0
        %1316 = vmatpush1.msra.mxu0 0.0
        %1317 = vmatprep.subr.mxu0 0.0
        %1318 = vmatpush1.msra.mxu0 0.0
        %1319 = vmatprep.subr.mxu0 0.0
        %1320 = vmatpush1.msra.mxu0 0.0
        %1321 = vmatprep.subr.mxu0 0.0
        %1322 = vmatpush1.msra.mxu0 0.0
        %1323 = vmatprep.subr.mxu0 0.0
        %1324 = vmatpush1.msra.mxu0 0.0
        %1325 = vmatprep.subr.mxu0 0.0
        %1326 = vmatpush1.msra.mxu0 0.0
        %1327 = vmatprep.subr.mxu0 0.0
        %1328 = vmatpush1.msra.mxu0 0.0
        %1329 = vmatprep.subr.mxu0 0.0
        %1330 = vmatpush1.msra.mxu0 %v1288
        %1331 = vmatprep.subr.mxu0 0.0
        %1332 = vmatpush1.msra.mxu0 %v1287
        %1333 = vmatprep.subr.mxu0 0.0
        %1334 = vmatpush1.msra.mxu0 %v1276
        %1335 = vmatprep.subr.mxu0 0.0
        %1336 = vmatpush1.msra.mxu0 %v1275
        %1337 = vmatprep.subr.mxu0 0.0
        %1338 = vmatpush1.msra.mxu0 %v1282
        %1339 = vmatprep.subr.mxu0 0.0
        %1340 = vmatpush1.msra.mxu0 %v1281
        %1341 = vmatprep.subr.mxu0 0.0
        %1342 = vmatpush2.msra.mxu0 0.0
        %1343 = vmatprep.subr.mxu0 0.0
        %1344 = vmatpush2.msra.mxu0 0.0
        %1345 = vmatprep.subr.mxu0 0.0
        %1346 = vmatpush2.msra.mxu0 0.0
        %1347 = vmatprep.subr.mxu0 0.0
        %1348 = vmatpush2.msra.mxu0 0.0
        %1349 = vmatprep.subr.mxu0 0.0
        %1350 = vmatpush2.msra.mxu0 0.0
        %1351 = vmatprep.subr.mxu0 0.0
        %1352 = vmatpush2.msra.mxu0 0.0
        %1353 = vmatprep.subr.mxu0 0.0
        %1354 = vmatpush2.msra.mxu0 0.0
        %1355 = vmatprep.subr.mxu0 0.0
        %1356 = vmatpush2.msra.mxu0 0.0
        %1357 = vmatprep.subr.mxu0 0.0
        %1358 = vmatpush2.msra.mxu0 0.0
        %1359 = vmatprep.subr.mxu0 0.0
        %1360 = vmatpush2.msra.mxu0 0.0
        %1361 = vmatprep.subr.mxu0 0.0
        %1362 = vmatpush2.msra.mxu0 0.0
        %1363 = vmatprep.subr.mxu0 0.0
        %1364 = vmatpush2.msra.mxu0 0.0
        %1365 = vmatprep.subr.mxu0 0.0
        %1366 = vmatpush2.msra.mxu0 0.0
        %1367 = vmatprep.subr.mxu0 0.0
        %1368 = vmatpush2.msra.mxu0 0.0
        %1369 = vmatprep.subr.mxu0 0.0
        %1370 = vmatpush2.msra.mxu0 0.0
        %1371 = vmatprep.subr.mxu0 0.0
        %1372 = vmatpush2.msra.mxu0 0.0
        %1373 = vmatprep.mubr.f32.mxu0 0.0
        %1374 = vmatmul.mubr.f32.gmra.mxu0 %v1304
        %v1375 = vpop.f32.mrf.mxu0
        %v1376 = vadd.f32 %v1296, %v1375
        %v1377 = vpop.f32.mrf.mxu0
        %1378 = vmatprep.mubr.f32.mxu0 0.0
        %1379 = vmatmul.mubr.f32.gmra.mxu0 %v1307
        %v1380 = vpop.f32.mrf.mxu0
        %v1381 = vadd.f32 %v1301, %v1380
        %v1382 = vpop.f32.mrf.mxu0
        %1383 = vdwg.mxu0
        %v1384 = vadd.f32 %v1376, %v1166
        %v1385 = vadd.f32 %v1381, %v1167
        %v1386 = vmax.f32 %v1384, 0.0
        %v1387 = vmax.f32 %v1385, 0.0
        %1388 = vrot.lane.b32.xlu0 %v1386, 1
        %v1389 = vpop.permute.xlu0 %1388
        %1390 = vrot.lane.b32.xlu0 %v1387, 1
        %v1391 = vpop.permute.xlu0 %1390
        %v1392 = vsel %vm768, %v1389, 0.0
        %v1393 = vsel %vm768, %v1391, 0.0
        %1394 = vrot.lane.b32.xlu0 %v1386, 127
        %v1395 = vpop.permute.xlu0 %1394
        %1396 = vrot.lane.b32.xlu0 %v1387, 127
        %v1397 = vpop.permute.xlu0 %1396
        %v1398 = vsel %vm773, %v1395, 0.0
        %v1399 = vsel %vm773, %v1397, 0.0
        %v1400 = vld [vmem:[%s13] sm:$0xff]
        %v1401 = vld [vmem:[%s13 + $0x8] sm:$0xff]
        %v1402 = vld [vmem:[%s13 + $0x10] sm:$0xff]
        %v1403 = vld [vmem:[%s13 + $0x18] sm:$0xff]
        %v1404 = vld [vmem:[%s14] sm:$0xff]
        %v1405 = vld [vmem:[%s14 + $0x8] sm:$0xff]
        %v1406 = vld [vmem:[%s14 + $0x10] sm:$0xff]
        %v1407 = vld [vmem:[%s14 + $0x18] sm:$0xff]
        %1409 = vset.pattern.permute.xlu0 0
        %1410 = vperm.xlu0 %1409, %v1404
        %v1411 = vpop.permute.xlu0 %1410
        %1414 = vset.pattern.permute.xlu0 0
        %1415 = vperm.xlu0 %1414, %v1405
        %v1416 = vpop.permute.xlu0 %1415
        %1419 = vset.pattern.permute.xlu0 0
        %1420 = vperm.xlu0 %1419, %v1406
        %v1421 = vpop.permute.xlu0 %1420
        %1424 = vset.pattern.permute.xlu0 0
        %1425 = vperm.xlu0 %1424, %v1407
        %v1426 = vpop.permute.xlu0 %1425
        %v1429 = vsel %vm986, %v1400, 0
        %v1432 = vsel %vm986, %v1401, 0
        %v1435 = vsel %vm986, %v1402, 0
        %v1438 = vsel %vm986, %v1403, 0
        %1440 = vmatprep.subr.mxu0 0.0
        %1441 = vmatpush1.msra.mxu0 0.0
        %1442 = vmatprep.subr.mxu0 0.0
        %1443 = vmatpush1.msra.mxu0 0.0
        %1444 = vmatprep.subr.mxu0 0.0
        %1445 = vmatpush1.msra.mxu0 0.0
        %1446 = vmatprep.subr.mxu0 0.0
        %1447 = vmatpush1.msra.mxu0 0.0
        %1448 = vmatprep.subr.mxu0 0.0
        %1449 = vmatpush1.msra.mxu0 0.0
        %1450 = vmatprep.subr.mxu0 0.0
        %1451 = vmatpush1.msra.mxu0 0.0
        %1452 = vmatprep.subr.mxu0 0.0
        %1453 = vmatpush1.msra.mxu0 0.0
        %1454 = vmatprep.subr.mxu0 0.0
        %1455 = vmatpush1.msra.mxu0 0.0
        %1456 = vmatprep.subr.mxu0 0.0
        %1457 = vmatpush1.msra.mxu0 0.0
        %1458 = vmatprep.subr.mxu0 0.0
        %1459 = vmatpush1.msra.mxu0 0.0
        %1460 = vmatprep.subr.mxu0 0.0
        %1461 = vmatpush1.msra.mxu0 %v1399
        %1462 = vmatprep.subr.mxu0 0.0
        %1463 = vmatpush1.msra.mxu0 %v1398
        %1464 = vmatprep.subr.mxu0 0.0
        %1465 = vmatpush1.msra.mxu0 %v1387
        %1466 = vmatprep.subr.mxu0 0.0
        %1467 = vmatpush1.msra.mxu0 %v1386
        %1468 = vmatprep.subr.mxu0 0.0
        %1469 = vmatpush1.msra.mxu0 %v1393
        %1470 = vmatprep.subr.mxu0 0.0
        %1471 = vmatpush1.msra.mxu0 %v1392
        %1472 = vmatprep.subr.mxu0 0.0
        %1473 = vmatpush2.msra.mxu0 0.0
        %1474 = vmatprep.subr.mxu0 0.0
        %1475 = vmatpush2.msra.mxu0 0.0
        %1476 = vmatprep.subr.mxu0 0.0
        %1477 = vmatpush2.msra.mxu0 0.0
        %1478 = vmatprep.subr.mxu0 0.0
        %1479 = vmatpush2.msra.mxu0 0.0
        %1480 = vmatprep.subr.mxu0 0.0
        %1481 = vmatpush2.msra.mxu0 0.0
        %1482 = vmatprep.subr.mxu0 0.0
        %1483 = vmatpush2.msra.mxu0 0.0
        %1484 = vmatprep.subr.mxu0 0.0
        %1485 = vmatpush2.msra.mxu0 0.0
        %1486 = vmatprep.subr.mxu0 0.0
        %1487 = vmatpush2.msra.mxu0 0.0
        %1488 = vmatprep.subr.mxu0 0.0
        %1489 = vmatpush2.msra.mxu0 0.0
        %1490 = vmatprep.subr.mxu0 0.0
        %1491 = vmatpush2.msra.mxu0 0.0
        %1492 = vmatprep.subr.mxu0 0.0
        %1493 = vmatpush2.msra.mxu0 0.0
        %1494 = vmatprep.subr.mxu0 0.0
        %1495 = vmatpush2.msra.mxu0 0.0
        %1496 = vmatprep.subr.mxu0 0.0
        %1497 = vmatpush2.msra.mxu0 0.0
        %1498 = vmatprep.subr.mxu0 0.0
        %1499 = vmatpush2.msra.mxu0 0.0
        %1500 = vmatprep.subr.mxu0 0.0
        %1501 = vmatpush2.msra.mxu0 0.0
        %1502 = vmatprep.subr.mxu0 0.0
        %1503 = vmatpush2.msra.mxu0 0.0
        %1504 = vmatprep.mubr.f32.mxu0 0.0
        %1505 = vmatmul.mubr.f32.gmra.mxu0 %v1429
        %v1506 = vpop.f32.mrf.mxu0
        %v1507 = vadd.f32 %v1411, %v1506
        %v1508 = vpop.f32.mrf.mxu0
        %1509 = vmatprep.mubr.f32.mxu0 0.0
        %1510 = vmatmul.mubr.f32.gmra.mxu0 %v1432
        %v1511 = vpop.f32.mrf.mxu0
        %v1512 = vadd.f32 %v1416, %v1511
        %v1513 = vpop.f32.mrf.mxu0
        %1514 = vmatprep.mubr.f32.mxu0 0.0
        %1515 = vmatmul.mubr.f32.gmra.mxu0 %v1435
        %v1516 = vpop.f32.mrf.mxu0
        %v1517 = vadd.f32 %v1421, %v1516
        %v1518 = vpop.f32.mrf.mxu0
        %1519 = vmatprep.mubr.f32.mxu0 0.0
        %1520 = vmatmul.mubr.f32.gmra.mxu0 %v1438
        %v1521 = vpop.f32.mrf.mxu0
        %v1522 = vadd.f32 %v1426, %v1521
        %v1523 = vpop.f32.mrf.mxu0
        %1524 = vdwg.mxu0
        %v1525 = vmax.f32 %v1507, 0.0
        %v1526 = vmax.f32 %v1512, 0.0
        %v1527 = vmax.f32 %v1517, 0.0
        %v1528 = vmax.f32 %v1522, 0.0
        %1529 = vrot.lane.b32.xlu0 %v1525, 1
        %v1530 = vpop.permute.xlu0 %1529
        %1531 = vrot.lane.b32.xlu0 %v1526, 1
        %v1532 = vpop.permute.xlu0 %1531
        %1533 = vrot.lane.b32.xlu0 %v1527, 1
        %v1534 = vpop.permute.xlu0 %1533
        %1535 = vrot.lane.b32.xlu0 %v1528, 1
        %v1536 = vpop.permute.xlu0 %1535
        %v1537 = vsel %vm768, %v1530, 0.0
        %v1538 = vsel %vm768, %v1532, 0.0
        %v1539 = vsel %vm768, %v1534, 0.0
        %v1540 = vsel %vm768, %v1536, 0.0
        %1541 = vrot.lane.b32.xlu0 %v1525, 127
        %v1542 = vpop.permute.xlu0 %1541
        %1543 = vrot.lane.b32.xlu0 %v1526, 127
        %v1544 = vpop.permute.xlu0 %1543
        %1545 = vrot.lane.b32.xlu0 %v1527, 127
        %v1546 = vpop.permute.xlu0 %1545
        %1547 = vrot.lane.b32.xlu0 %v1528, 127
        %v1548 = vpop.permute.xlu0 %1547
        %v1549 = vsel %vm773, %v1542, 0.0
        %v1550 = vsel %vm773, %v1544, 0.0
        %v1551 = vsel %vm773, %v1546, 0.0
        %v1552 = vsel %vm773, %v1548, 0.0
        %v1553 = vld [vmem:[%s15] sm:$0xff]
        %v1554 = vld [vmem:[%s15 + $0x8] sm:$0xff]
        %v1555 = vld [vmem:[%s15 + $0x10] sm:$0xff]
        %v1556 = vld [vmem:[%s15 + $0x18] sm:$0xff]
        %v1557 = vld [vmem:[%s16] sm:$0xff]
        %v1558 = vld [vmem:[%s16 + $0x8] sm:$0xff]
        %v1559 = vld [vmem:[%s16 + $0x10] sm:$0xff]
        %v1560 = vld [vmem:[%s16 + $0x18] sm:$0xff]
        %1562 = vset.pattern.permute.xlu0 0
        %1563 = vperm.xlu0 %1562, %v1557
        %v1564 = vpop.permute.xlu0 %1563
        %1567 = vset.pattern.permute.xlu0 0
        %1568 = vperm.xlu0 %1567, %v1558
        %v1569 = vpop.permute.xlu0 %1568
        %1572 = vset.pattern.permute.xlu0 0
        %1573 = vperm.xlu0 %1572, %v1559
        %v1574 = vpop.permute.xlu0 %1573
        %1577 = vset.pattern.permute.xlu0 0
        %1578 = vperm.xlu0 %1577, %v1560
        %v1579 = vpop.permute.xlu0 %1578
        %vm1581 = vcmask 785408
        %v1583 = vsel %vm1581, %v1553, 0
        %v1586 = vsel %vm1581, %v1554, 0
        %v1589 = vsel %vm1581, %v1555, 0
        %v1592 = vsel %vm1581, %v1556, 0
        %1594 = vmatprep.subr.mxu0 0.0
        %1595 = vmatpush1.msra.mxu0 0.0
        %1596 = vmatprep.subr.mxu0 0.0
        %1597 = vmatpush1.msra.mxu0 0.0
        %1598 = vmatprep.subr.mxu0 0.0
        %1599 = vmatpush1.msra.mxu0 0.0
        %1600 = vmatprep.subr.mxu0 0.0
        %1601 = vmatpush1.msra.mxu0 0.0
        %1602 = vmatprep.subr.mxu0 0.0
        %1603 = vmatpush1.msra.mxu0 %v1552
        %1604 = vmatprep.subr.mxu0 0.0
        %1605 = vmatpush1.msra.mxu0 %v1551
        %1606 = vmatprep.subr.mxu0 0.0
        %1607 = vmatpush1.msra.mxu0 %v1550
        %1608 = vmatprep.subr.mxu0 0.0
        %1609 = vmatpush1.msra.mxu0 %v1549
        %1610 = vmatprep.subr.mxu0 0.0
        %1611 = vmatpush1.msra.mxu0 %v1528
        %1612 = vmatprep.subr.mxu0 0.0
        %1613 = vmatpush1.msra.mxu0 %v1527
        %1614 = vmatprep.subr.mxu0 0.0
        %1615 = vmatpush1.msra.mxu0 %v1526
        %1616 = vmatprep.subr.mxu0 0.0
        %1617 = vmatpush1.msra.mxu0 %v1525
        %1618 = vmatprep.subr.mxu0 0.0
        %1619 = vmatpush1.msra.mxu0 %v1540
        %1620 = vmatprep.subr.mxu0 0.0
        %1621 = vmatpush1.msra.mxu0 %v1539
        %1622 = vmatprep.subr.mxu0 0.0
        %1623 = vmatpush1.msra.mxu0 %v1538
        %1624 = vmatprep.subr.mxu0 0.0
        %1625 = vmatpush1.msra.mxu0 %v1537
        %1626 = vmatprep.subr.mxu0 0.0
        %1627 = vmatpush2.msra.mxu0 0.0
        %1628 = vmatprep.subr.mxu0 0.0
        %1629 = vmatpush2.msra.mxu0 0.0
        %1630 = vmatprep.subr.mxu0 0.0
        %1631 = vmatpush2.msra.mxu0 0.0
        %1632 = vmatprep.subr.mxu0 0.0
        %1633 = vmatpush2.msra.mxu0 0.0
        %1634 = vmatprep.subr.mxu0 0.0
        %1635 = vmatpush2.msra.mxu0 0.0
        %1636 = vmatprep.subr.mxu0 0.0
        %1637 = vmatpush2.msra.mxu0 0.0
        %1638 = vmatprep.subr.mxu0 0.0
        %1639 = vmatpush2.msra.mxu0 0.0
        %1640 = vmatprep.subr.mxu0 0.0
        %1641 = vmatpush2.msra.mxu0 0.0
        %1642 = vmatprep.subr.mxu0 0.0
        %1643 = vmatpush2.msra.mxu0 0.0
        %1644 = vmatprep.subr.mxu0 0.0
        %1645 = vmatpush2.msra.mxu0 0.0
        %1646 = vmatprep.subr.mxu0 0.0
        %1647 = vmatpush2.msra.mxu0 0.0
        %1648 = vmatprep.subr.mxu0 0.0
        %1649 = vmatpush2.msra.mxu0 0.0
        %1650 = vmatprep.subr.mxu0 0.0
        %1651 = vmatpush2.msra.mxu0 0.0
        %1652 = vmatprep.subr.mxu0 0.0
        %1653 = vmatpush2.msra.mxu0 0.0
        %1654 = vmatprep.subr.mxu0 0.0
        %1655 = vmatpush2.msra.mxu0 0.0
        %1656 = vmatprep.subr.mxu0 0.0
        %1657 = vmatpush2.msra.mxu0 0.0
        %1658 = vmatprep.mubr.f32.mxu0 0.0
        %1659 = vmatmul.mubr.f32.gmra.mxu0 %v1583
        %v1660 = vpop.f32.mrf.mxu0
        %v1661 = vadd.f32 %v1564, %v1660
        %v1662 = vpop.f32.mrf.mxu0
        %1663 = vmatprep.mubr.f32.mxu0 0.0
        %1664 = vmatmul.mubr.f32.gmra.mxu0 %v1586
        %v1665 = vpop.f32.mrf.mxu0
        %v1666 = vadd.f32 %v1569, %v1665
        %v1667 = vpop.f32.mrf.mxu0
        %1668 = vmatprep.mubr.f32.mxu0 0.0
        %1669 = vmatmul.mubr.f32.gmra.mxu0 %v1589
        %v1670 = vpop.f32.mrf.mxu0
        %v1671 = vadd.f32 %v1574, %v1670
        %v1672 = vpop.f32.mrf.mxu0
        %1673 = vmatprep.mubr.f32.mxu0 0.0
        %1674 = vmatmul.mubr.f32.gmra.mxu0 %v1592
        %v1675 = vpop.f32.mrf.mxu0
        %v1676 = vadd.f32 %v1579, %v1675
        %v1677 = vpop.f32.mrf.mxu0
        %1678 = vdwg.mxu0
        %v1679 = vld [vmem:[%s17] sm:$0xff]
        %v1680 = vld [vmem:[%s17 + $0x8] sm:$0xff]
        %v1681 = vld [vmem:[%s17 + $0x10] sm:$0xff]
        %v1682 = vld [vmem:[%s17 + $0x18] sm:$0xff]
        %v1683 = vld [vmem:[%s18] sm:$0xff]
        %v1684 = vld [vmem:[%s18 + $0x8] sm:$0xff]
        %v1685 = vld [vmem:[%s18 + $0x10] sm:$0xff]
        %v1686 = vld [vmem:[%s18 + $0x18] sm:$0xff]
        %1688 = vset.pattern.permute.xlu0 0
        %1689 = vperm.xlu0 %1688, %v1683
        %v1690 = vpop.permute.xlu0 %1689
        %1693 = vset.pattern.permute.xlu0 0
        %1694 = vperm.xlu0 %1693, %v1684
        %v1695 = vpop.permute.xlu0 %1694
        %1698 = vset.pattern.permute.xlu0 0
        %1699 = vperm.xlu0 %1698, %v1685
        %v1700 = vpop.permute.xlu0 %1699
        %1703 = vset.pattern.permute.xlu0 0
        %1704 = vperm.xlu0 %1703, %v1686
        %v1705 = vpop.permute.xlu0 %1704
        %vm1707 = vcmask 130048
        %v1709 = vsel %vm1707, %v1679, 0
        %v1712 = vsel %vm1707, %v1680, 0
        %v1715 = vsel %vm1707, %v1681, 0
        %v1718 = vsel %vm1707, %v1682, 0
        %1720 = vmatprep.subr.mxu0 0.0
        %1721 = vmatpush1.msra.mxu0 0.0
        %1722 = vmatprep.subr.mxu0 0.0
        %1723 = vmatpush1.msra.mxu0 0.0
        %1724 = vmatprep.subr.mxu0 0.0
        %1725 = vmatpush1.msra.mxu0 0.0
        %1726 = vmatprep.subr.mxu0 0.0
        %1727 = vmatpush1.msra.mxu0 0.0
        %1728 = vmatprep.subr.mxu0 0.0
        %1729 = vmatpush1.msra.mxu0 0.0
        %1730 = vmatprep.subr.mxu0 0.0
        %1731 = vmatpush1.msra.mxu0 0.0
        %1732 = vmatprep.subr.mxu0 0.0
        %1733 = vmatpush1.msra.mxu0 0.0
        %1734 = vmatprep.subr.mxu0 0.0
        %1735 = vmatpush1.msra.mxu0 0.0
        %1736 = vmatprep.subr.mxu0 0.0
        %1737 = vmatpush1.msra.mxu0 0.0
        %1738 = vmatprep.subr.mxu0 0.0
        %1739 = vmatpush1.msra.mxu0 0.0
        %1740 = vmatprep.subr.mxu0 0.0
        %1741 = vmatpush1.msra.mxu0 0.0
        %1742 = vmatprep.subr.mxu0 0.0
        %1743 = vmatpush1.msra.mxu0 0.0
        %1744 = vmatprep.subr.mxu0 0.0
        %1745 = vmatpush1.msra.mxu0 0.0
        %1746 = vmatprep.subr.mxu0 0.0
        %1747 = vmatpush1.msra.mxu0 0.0
        %1748 = vmatprep.subr.mxu0 0.0
        %1749 = vmatpush1.msra.mxu0 %v1387
        %1750 = vmatprep.subr.mxu0 0.0
        %1751 = vmatpush1.msra.mxu0 %v1386
        %1752 = vmatprep.subr.mxu0 0.0
        %1753 = vmatpush2.msra.mxu0 0.0
        %1754 = vmatprep.subr.mxu0 0.0
        %1755 = vmatpush2.msra.mxu0 0.0
        %1756 = vmatprep.subr.mxu0 0.0
        %1757 = vmatpush2.msra.mxu0 0.0
        %1758 = vmatprep.subr.mxu0 0.0
        %1759 = vmatpush2.msra.mxu0 0.0
        %1760 = vmatprep.subr.mxu0 0.0
        %1761 = vmatpush2.msra.mxu0 0.0
        %1762 = vmatprep.subr.mxu0 0.0
        %1763 = vmatpush2.msra.mxu0 0.0
        %1764 = vmatprep.subr.mxu0 0.0
        %1765 = vmatpush2.msra.mxu0 0.0
        %1766 = vmatprep.subr.mxu0 0.0
        %1767 = vmatpush2.msra.mxu0 0.0
        %1768 = vmatprep.subr.mxu0 0.0
        %1769 = vmatpush2.msra.mxu0 0.0
        %1770 = vmatprep.subr.mxu0 0.0
        %1771 = vmatpush2.msra.mxu0 0.0
        %1772 = vmatprep.subr.mxu0 0.0
        %1773 = vmatpush2.msra.mxu0 0.0
        %1774 = vmatprep.subr.mxu0 0.0
        %1775 = vmatpush2.msra.mxu0 0.0
        %1776 = vmatprep.subr.mxu0 0.0
        %1777 = vmatpush2.msra.mxu0 0.0
        %1778 = vmatprep.subr.mxu0 0.0
        %1779 = vmatpush2.msra.mxu0 0.0
        %1780 = vmatprep.subr.mxu0 0.0
        %1781 = vmatpush2.msra.mxu0 0.0
        %1782 = vmatprep.subr.mxu0 0.0
        %1783 = vmatpush2.msra.mxu0 0.0
        %1784 = vmatprep.mubr.f32.mxu0 0.0
        %1785 = vmatmul.mubr.f32.gmra.mxu0 %v1709
        %v1786 = vpop.f32.mrf.mxu0
        %v1787 = vadd.f32 %v1690, %v1786
        %v1788 = vpop.f32.mrf.mxu0
        %1789 = vmatprep.mubr.f32.mxu0 0.0
        %1790 = vmatmul.mubr.f32.gmra.mxu0 %v1712
        %v1791 = vpop.f32.mrf.mxu0
        %v1792 = vadd.f32 %v1695, %v1791
        %v1793 = vpop.f32.mrf.mxu0
        %1794 = vmatprep.mubr.f32.mxu0 0.0
        %1795 = vmatmul.mubr.f32.gmra.mxu0 %v1715
        %v1796 = vpop.f32.mrf.mxu0
        %v1797 = vadd.f32 %v1700, %v1796
        %v1798 = vpop.f32.mrf.mxu0
        %1799 = vmatprep.mubr.f32.mxu0 0.0
        %1800 = vmatmul.mubr.f32.gmra.mxu0 %v1718
        %v1801 = vpop.f32.mrf.mxu0
        %v1802 = vadd.f32 %v1705, %v1801
        %v1803 = vpop.f32.mrf.mxu0
        %1804 = vdwg.mxu0
        %v1805 = vadd.f32 %v1661, %v1787
        %v1806 = vadd.f32 %v1666, %v1792
        %v1807 = vadd.f32 %v1671, %v1797
        %v1808 = vadd.f32 %v1676, %v1802
        %v1809 = vmax.f32 %v1805, 0.0
        %v1810 = vmax.f32 %v1806, 0.0
        %v1811 = vmax.f32 %v1807, 0.0
        %v1812 = vmax.f32 %v1808, 0.0
        %1813 = vrot.lane.b32.xlu0 %v1809, 1
        %v1814 = vpop.permute.xlu0 %1813
        %1815 = vrot.lane.b32.xlu0 %v1810, 1
        %v1816 = vpop.permute.xlu0 %1815
        %1817 = vrot.lane.b32.xlu0 %v1811, 1
        %v1818 = vpop.permute.xlu0 %1817
        %1819 = vrot.lane.b32.xlu0 %v1812, 1
        %v1820 = vpop.permute.xlu0 %1819
        %v1821 = vsel %vm768, %v1814, 0.0
        %v1822 = vsel %vm768, %v1816, 0.0
        %v1823 = vsel %vm768, %v1818, 0.0
        %v1824 = vsel %vm768, %v1820, 0.0
        %1825 = vrot.lane.b32.xlu0 %v1809, 127
        %v1826 = vpop.permute.xlu0 %1825
        %1827 = vrot.lane.b32.xlu0 %v1810, 127
        %v1828 = vpop.permute.xlu0 %1827
        %1829 = vrot.lane.b32.xlu0 %v1811, 127
        %v1830 = vpop.permute.xlu0 %1829
        %1831 = vrot.lane.b32.xlu0 %v1812, 127
        %v1832 = vpop.permute.xlu0 %1831
        %v1833 = vsel %vm773, %v1826, 0.0
        %v1834 = vsel %vm773, %v1828, 0.0
        %v1835 = vsel %vm773, %v1830, 0.0
        %v1836 = vsel %vm773, %v1832, 0.0
        %v1837 = vld [vmem:[%s19] sm:$0xff]
        %v1838 = vld [vmem:[%s19 + $0x8] sm:$0xff]
        %v1839 = vld [vmem:[%s19 + $0x10] sm:$0xff]
        %v1840 = vld [vmem:[%s19 + $0x18] sm:$0xff]
        %v1841 = vld [vmem:[%s20] sm:$0xff]
        %v1842 = vld [vmem:[%s20 + $0x8] sm:$0xff]
        %v1843 = vld [vmem:[%s20 + $0x10] sm:$0xff]
        %v1844 = vld [vmem:[%s20 + $0x18] sm:$0xff]
        %1846 = vset.pattern.permute.xlu0 0
        %1847 = vperm.xlu0 %1846, %v1841
        %v1848 = vpop.permute.xlu0 %1847
        %1851 = vset.pattern.permute.xlu0 0
        %1852 = vperm.xlu0 %1851, %v1842
        %v1853 = vpop.permute.xlu0 %1852
        %1856 = vset.pattern.permute.xlu0 0
        %1857 = vperm.xlu0 %1856, %v1843
        %v1858 = vpop.permute.xlu0 %1857
        %1861 = vset.pattern.permute.xlu0 0
        %1862 = vperm.xlu0 %1861, %v1844
        %v1863 = vpop.permute.xlu0 %1862
        %v1866 = vsel %vm1581, %v1837, 0
        %v1869 = vsel %vm1581, %v1838, 0
        %v1872 = vsel %vm1581, %v1839, 0
        %v1875 = vsel %vm1581, %v1840, 0
        %1877 = vmatprep.subr.mxu0 0.0
        %1878 = vmatpush1.msra.mxu0 0.0
        %1879 = vmatprep.subr.mxu0 0.0
        %1880 = vmatpush1.msra.mxu0 0.0
        %1881 = vmatprep.subr.mxu0 0.0
        %1882 = vmatpush1.msra.mxu0 0.0
        %1883 = vmatprep.subr.mxu0 0.0
        %1884 = vmatpush1.msra.mxu0 0.0
        %1885 = vmatprep.subr.mxu0 0.0
        %1886 = vmatpush1.msra.mxu0 %v1836
        %1887 = vmatprep.subr.mxu0 0.0
        %1888 = vmatpush1.msra.mxu0 %v1835
        %1889 = vmatprep.subr.mxu0 0.0
        %1890 = vmatpush1.msra.mxu0 %v1834
        %1891 = vmatprep.subr.mxu0 0.0
        %1892 = vmatpush1.msra.mxu0 %v1833
        %1893 = vmatprep.subr.mxu0 0.0
        %1894 = vmatpush1.msra.mxu0 %v1812
        %1895 = vmatprep.subr.mxu0 0.0
        %1896 = vmatpush1.msra.mxu0 %v1811
        %1897 = vmatprep.subr.mxu0 0.0
        %1898 = vmatpush1.msra.mxu0 %v1810
        %1899 = vmatprep.subr.mxu0 0.0
        %1900 = vmatpush1.msra.mxu0 %v1809
        %1901 = vmatprep.subr.mxu0 0.0
        %1902 = vmatpush1.msra.mxu0 %v1824
        %1903 = vmatprep.subr.mxu0 0.0
        %1904 = vmatpush1.msra.mxu0 %v1823
        %1905 = vmatprep.subr.mxu0 0.0
        %1906 = vmatpush1.msra.mxu0 %v1822
        %1907 = vmatprep.subr.mxu0 0.0
        %1908 = vmatpush1.msra.mxu0 %v1821
        %1909 = vmatprep.subr.mxu0 0.0
        %1910 = vmatpush2.msra.mxu0 0.0
        %1911 = vmatprep.subr.mxu0 0.0
        %1912 = vmatpush2.msra.mxu0 0.0
        %1913 = vmatprep.subr.mxu0 0.0
        %1914 = vmatpush2.msra.mxu0 0.0
        %1915 = vmatprep.subr.mxu0 0.0
        %1916 = vmatpush2.msra.mxu0 0.0
        %1917 = vmatprep.subr.mxu0 0.0
        %1918 = vmatpush2.msra.mxu0 0.0
        %1919 = vmatprep.subr.mxu0 0.0
        %1920 = vmatpush2.msra.mxu0 0.0
        %1921 = vmatprep.subr.mxu0 0.0
        %1922 = vmatpush2.msra.mxu0 0.0
        %1923 = vmatprep.subr.mxu0 0.0
        %1924 = vmatpush2.msra.mxu0 0.0
        %1925 = vmatprep.subr.mxu0 0.0
        %1926 = vmatpush2.msra.mxu0 0.0
        %1927 = vmatprep.subr.mxu0 0.0
        %1928 = vmatpush2.msra.mxu0 0.0
        %1929 = vmatprep.subr.mxu0 0.0
        %1930 = vmatpush2.msra.mxu0 0.0
        %1931 = vmatprep.subr.mxu0 0.0
        %1932 = vmatpush2.msra.mxu0 0.0
        %1933 = vmatprep.subr.mxu0 0.0
        %1934 = vmatpush2.msra.mxu0 0.0
        %1935 = vmatprep.subr.mxu0 0.0
        %1936 = vmatpush2.msra.mxu0 0.0
        %1937 = vmatprep.subr.mxu0 0.0
        %1938 = vmatpush2.msra.mxu0 0.0
        %1939 = vmatprep.subr.mxu0 0.0
        %1940 = vmatpush2.msra.mxu0 0.0
        %1941 = vmatprep.mubr.f32.mxu0 0.0
        %1942 = vmatmul.mubr.f32.gmra.mxu0 %v1866
        %v1943 = vpop.f32.mrf.mxu0
        %v1944 = vadd.f32 %v1848, %v1943
        %v1945 = vpop.f32.mrf.mxu0
        %1946 = vmatprep.mubr.f32.mxu0 0.0
        %1947 = vmatmul.mubr.f32.gmra.mxu0 %v1869
        %v1948 = vpop.f32.mrf.mxu0
        %v1949 = vadd.f32 %v1853, %v1948
        %v1950 = vpop.f32.mrf.mxu0
        %1951 = vmatprep.mubr.f32.mxu0 0.0
        %1952 = vmatmul.mubr.f32.gmra.mxu0 %v1872
        %v1953 = vpop.f32.mrf.mxu0
        %v1954 = vadd.f32 %v1858, %v1953
        %v1955 = vpop.f32.mrf.mxu0
        %1956 = vmatprep.mubr.f32.mxu0 0.0
        %1957 = vmatmul.mubr.f32.gmra.mxu0 %v1875
        %v1958 = vpop.f32.mrf.mxu0
        %v1959 = vadd.f32 %v1863, %v1958
        %v1960 = vpop.f32.mrf.mxu0
        %1961 = vdwg.mxu0
        %v1962 = vmax.f32 %v1944, 0.0
        %v1963 = vmax.f32 %v1949, 0.0
        %v1964 = vmax.f32 %v1954, 0.0
        %v1965 = vmax.f32 %v1959, 0.0
        %1966 = vrot.lane.b32.xlu0 %v1962, 1
        %v1967 = vpop.permute.xlu0 %1966
        %1968 = vrot.lane.b32.xlu0 %v1963, 1
        %v1969 = vpop.permute.xlu0 %1968
        %1970 = vrot.lane.b32.xlu0 %v1964, 1
        %v1971 = vpop.permute.xlu0 %1970
        %1972 = vrot.lane.b32.xlu0 %v1965, 1
        %v1973 = vpop.permute.xlu0 %1972
        %v1974 = vsel %vm768, %v1967, 0.0
        %v1975 = vsel %vm768, %v1969, 0.0
        %v1976 = vsel %vm768, %v1971, 0.0
        %v1977 = vsel %vm768, %v1973, 0.0
        %1978 = vrot.lane.b32.xlu0 %v1962, 127
        %v1979 = vpop.permute.xlu0 %1978
        %1980 = vrot.lane.b32.xlu0 %v1963, 127
        %v1981 = vpop.permute.xlu0 %1980
        %1982 = vrot.lane.b32.xlu0 %v1964, 127
        %v1983 = vpop.permute.xlu0 %1982
        %1984 = vrot.lane.b32.xlu0 %v1965, 127
        %v1985 = vpop.permute.xlu0 %1984
        %v1986 = vsel %vm773, %v1979, 0.0
        %v1987 = vsel %vm773, %v1981, 0.0
        %v1988 = vsel %vm773, %v1983, 0.0
        %v1989 = vsel %vm773, %v1985, 0.0
        %v1990 = vld [vmem:[%s21] sm:$0xff]
        %v1991 = vld [vmem:[%s21 + $0x8] sm:$0xff]
        %v1992 = vld [vmem:[%s21 + $0x10] sm:$0xff]
        %v1993 = vld [vmem:[%s21 + $0x18] sm:$0xff]
        %v1994 = vld [vmem:[%s22] sm:$0xff]
        %v1995 = vld [vmem:[%s22 + $0x8] sm:$0xff]
        %v1996 = vld [vmem:[%s22 + $0x10] sm:$0xff]
        %v1997 = vld [vmem:[%s22 + $0x18] sm:$0xff]
        %1999 = vset.pattern.permute.xlu0 0
        %2000 = vperm.xlu0 %1999, %v1994
        %v2001 = vpop.permute.xlu0 %2000
        %2004 = vset.pattern.permute.xlu0 0
        %2005 = vperm.xlu0 %2004, %v1995
        %v2006 = vpop.permute.xlu0 %2005
        %2009 = vset.pattern.permute.xlu0 0
        %2010 = vperm.xlu0 %2009, %v1996
        %v2011 = vpop.permute.xlu0 %2010
        %2014 = vset.pattern.permute.xlu0 0
        %2015 = vperm.xlu0 %2014, %v1997
        %v2016 = vpop.permute.xlu0 %2015
        %v2019 = vsel %vm1581, %v1990, 0
        %v2022 = vsel %vm1581, %v1991, 0
        %v2025 = vsel %vm1581, %v1992, 0
        %v2028 = vsel %vm1581, %v1993, 0
        %2030 = vmatprep.subr.mxu0 0.0
        %2031 = vmatpush1.msra.mxu0 0.0
        %2032 = vmatprep.subr.mxu0 0.0
        %2033 = vmatpush1.msra.mxu0 0.0
        %2034 = vmatprep.subr.mxu0 0.0
        %2035 = vmatpush1.msra.mxu0 0.0
        %2036 = vmatprep.subr.mxu0 0.0
        %2037 = vmatpush1.msra.mxu0 0.0
        %2038 = vmatprep.subr.mxu0 0.0
        %2039 = vmatpush1.msra.mxu0 %v1989
        %2040 = vmatprep.subr.mxu0 0.0
        %2041 = vmatpush1.msra.mxu0 %v1988
        %2042 = vmatprep.subr.mxu0 0.0
        %2043 = vmatpush1.msra.mxu0 %v1987
        %2044 = vmatprep.subr.mxu0 0.0
        %2045 = vmatpush1.msra.mxu0 %v1986
        %2046 = vmatprep.subr.mxu0 0.0
        %2047 = vmatpush1.msra.mxu0 %v1965
        %2048 = vmatprep.subr.mxu0 0.0
        %2049 = vmatpush1.msra.mxu0 %v1964
        %2050 = vmatprep.subr.mxu0 0.0
        %2051 = vmatpush1.msra.mxu0 %v1963
        %2052 = vmatprep.subr.mxu0 0.0
        %2053 = vmatpush1.msra.mxu0 %v1962
        %2054 = vmatprep.subr.mxu0 0.0
        %2055 = vmatpush1.msra.mxu0 %v1977
        %2056 = vmatprep.subr.mxu0 0.0
        %2057 = vmatpush1.msra.mxu0 %v1976
        %2058 = vmatprep.subr.mxu0 0.0
        %2059 = vmatpush1.msra.mxu0 %v1975
        %2060 = vmatprep.subr.mxu0 0.0
        %2061 = vmatpush1.msra.mxu0 %v1974
        %2062 = vmatprep.subr.mxu0 0.0
        %2063 = vmatpush2.msra.mxu0 0.0
        %2064 = vmatprep.subr.mxu0 0.0
        %2065 = vmatpush2.msra.mxu0 0.0
        %2066 = vmatprep.subr.mxu0 0.0
        %2067 = vmatpush2.msra.mxu0 0.0
        %2068 = vmatprep.subr.mxu0 0.0
        %2069 = vmatpush2.msra.mxu0 0.0
        %2070 = vmatprep.subr.mxu0 0.0
        %2071 = vmatpush2.msra.mxu0 0.0
        %2072 = vmatprep.subr.mxu0 0.0
        %2073 = vmatpush2.msra.mxu0 0.0
        %2074 = vmatprep.subr.mxu0 0.0
        %2075 = vmatpush2.msra.mxu0 0.0
        %2076 = vmatprep.subr.mxu0 0.0
        %2077 = vmatpush2.msra.mxu0 0.0
        %2078 = vmatprep.subr.mxu0 0.0
        %2079 = vmatpush2.msra.mxu0 0.0
        %2080 = vmatprep.subr.mxu0 0.0
        %2081 = vmatpush2.msra.mxu0 0.0
        %2082 = vmatprep.subr.mxu0 0.0
        %2083 = vmatpush2.msra.mxu0 0.0
        %2084 = vmatprep.subr.mxu0 0.0
        %2085 = vmatpush2.msra.mxu0 0.0
        %2086 = vmatprep.subr.mxu0 0.0
        %2087 = vmatpush2.msra.mxu0 0.0
        %2088 = vmatprep.subr.mxu0 0.0
        %2089 = vmatpush2.msra.mxu0 0.0
        %2090 = vmatprep.subr.mxu0 0.0
        %2091 = vmatpush2.msra.mxu0 0.0
        %2092 = vmatprep.subr.mxu0 0.0
        %2093 = vmatpush2.msra.mxu0 0.0
        %2094 = vmatprep.mubr.f32.mxu0 0.0
        %2095 = vmatmul.mubr.f32.gmra.mxu0 %v2019
        %v2096 = vpop.f32.mrf.mxu0
        %v2097 = vadd.f32 %v2001, %v2096
        %v2098 = vpop.f32.mrf.mxu0
        %2099 = vmatprep.mubr.f32.mxu0 0.0
        %2100 = vmatmul.mubr.f32.gmra.mxu0 %v2022
        %v2101 = vpop.f32.mrf.mxu0
        %v2102 = vadd.f32 %v2006, %v2101
        %v2103 = vpop.f32.mrf.mxu0
        %2104 = vmatprep.mubr.f32.mxu0 0.0
        %2105 = vmatmul.mubr.f32.gmra.mxu0 %v2025
        %v2106 = vpop.f32.mrf.mxu0
        %v2107 = vadd.f32 %v2011, %v2106
        %v2108 = vpop.f32.mrf.mxu0
        %2109 = vmatprep.mubr.f32.mxu0 0.0
        %2110 = vmatmul.mubr.f32.gmra.mxu0 %v2028
        %v2111 = vpop.f32.mrf.mxu0
        %v2112 = vadd.f32 %v2016, %v2111
        %v2113 = vpop.f32.mrf.mxu0
        %2114 = vdwg.mxu0
        %v2115 = vadd.f32 %v2097, %v1809
        %v2116 = vadd.f32 %v2102, %v1810
        %v2117 = vadd.f32 %v2107, %v1811
        %v2118 = vadd.f32 %v2112, %v1812
        %v2119 = vmax.f32 %v2115, 0.0
        %v2120 = vmax.f32 %v2116, 0.0
        %v2121 = vmax.f32 %v2117, 0.0
        %v2122 = vmax.f32 %v2118, 0.0
        %2123 = vrot.lane.b32.xlu0 %v2119, 1
        %v2124 = vpop.permute.xlu0 %2123
        %2125 = vrot.lane.b32.xlu0 %v2120, 1
        %v2126 = vpop.permute.xlu0 %2125
        %2127 = vrot.lane.b32.xlu0 %v2121, 1
        %v2128 = vpop.permute.xlu0 %2127
        %2129 = vrot.lane.b32.xlu0 %v2122, 1
        %v2130 = vpop.permute.xlu0 %2129
        %v2131 = vsel %vm768, %v2124, 0.0
        %v2132 = vsel %vm768, %v2126, 0.0
        %v2133 = vsel %vm768, %v2128, 0.0
        %v2134 = vsel %vm768, %v2130, 0.0
        %2135 = vrot.lane.b32.xlu0 %v2119, 127
        %v2136 = vpop.permute.xlu0 %2135
        %2137 = vrot.lane.b32.xlu0 %v2120, 127
        %v2138 = vpop.permute.xlu0 %2137
        %2139 = vrot.lane.b32.xlu0 %v2121, 127
        %v2140 = vpop.permute.xlu0 %2139
        %2141 = vrot.lane.b32.xlu0 %v2122, 127
        %v2142 = vpop.permute.xlu0 %2141
        %v2143 = vsel %vm773, %v2136, 0.0
        %v2144 = vsel %vm773, %v2138, 0.0
        %v2145 = vsel %vm773, %v2140, 0.0
        %v2146 = vsel %vm773, %v2142, 0.0
        %v2147 = vld [vmem:[%s23] sm:$0xff]
        %v2148 = vld [vmem:[%s24] sm:$0xff]
        %2150 = vset.pattern.permute.xlu0 0
        %2151 = vperm.xlu0 %2150, %v2148
        %v2152 = vpop.permute.xlu0 %2151
        %v2155 = vsel %vm1581, %v2147, 0
        %2157 = vmatprep.subr.mxu0 0.0
        %2158 = vmatpush1.msra.mxu0 0.0
        %2159 = vmatprep.subr.mxu0 0.0
        %2160 = vmatpush1.msra.mxu0 0.0
        %2161 = vmatprep.subr.mxu0 0.0
        %2162 = vmatpush1.msra.mxu0 0.0
        %2163 = vmatprep.subr.mxu0 0.0
        %2164 = vmatpush1.msra.mxu0 0.0
        %2165 = vmatprep.subr.mxu0 0.0
        %2166 = vmatpush1.msra.mxu0 %v2146
        %2167 = vmatprep.subr.mxu0 0.0
        %2168 = vmatpush1.msra.mxu0 %v2145
        %2169 = vmatprep.subr.mxu0 0.0
        %2170 = vmatpush1.msra.mxu0 %v2144
        %2171 = vmatprep.subr.mxu0 0.0
        %2172 = vmatpush1.msra.mxu0 %v2143
        %2173 = vmatprep.subr.mxu0 0.0
        %2174 = vmatpush1.msra.mxu0 %v2122
        %2175 = vmatprep.subr.mxu0 0.0
        %2176 = vmatpush1.msra.mxu0 %v2121
        %2177 = vmatprep.subr.mxu0 0.0
        %2178 = vmatpush1.msra.mxu0 %v2120
        %2179 = vmatprep.subr.mxu0 0.0
        %2180 = vmatpush1.msra.mxu0 %v2119
        %2181 = vmatprep.subr.mxu0 0.0
        %2182 = vmatpush1.msra.mxu0 %v2134
        %2183 = vmatprep.subr.mxu0 0.0
        %2184 = vmatpush1.msra.mxu0 %v2133
        %2185 = vmatprep.subr.mxu0 0.0
        %2186 = vmatpush1.msra.mxu0 %v2132
        %2187 = vmatprep.subr.mxu0 0.0
        %2188 = vmatpush1.msra.mxu0 %v2131
        %2189 = vmatprep.subr.mxu0 0.0
        %2190 = vmatpush2.msra.mxu0 0.0
        %2191 = vmatprep.subr.mxu0 0.0
        %2192 = vmatpush2.msra.mxu0 0.0
        %2193 = vmatprep.subr.mxu0 0.0
        %2194 = vmatpush2.msra.mxu0 0.0
        %2195 = vmatprep.subr.mxu0 0.0
        %2196 = vmatpush2.msra.mxu0 0.0
        %2197 = vmatprep.subr.mxu0 0.0
        %2198 = vmatpush2.msra.mxu0 0.0
        %2199 = vmatprep.subr.mxu0 0.0
        %2200 = vmatpush2.msra.mxu0 0.0
        %2201 = vmatprep.subr.mxu0 0.0
        %2202 = vmatpush2.msra.mxu0 0.0
        %2203 = vmatprep.subr.mxu0 0.0
        %2204 = vmatpush2.msra.mxu0 0.0
        %2205 = vmatprep.subr.mxu0 0.0
        %2206 = vmatpush2.msra.mxu0 0.0
        %2207 = vmatprep.subr.mxu0 0.0
        %2208 = vmatpush2.msra.mxu0 0.0
        %2209 = vmatprep.subr.mxu0 0.0
        %2210 = vmatpush2.msra.mxu0 0.0
        %2211 = vmatprep.subr.mxu0 0.0
        %2212 = vmatpush2.msra.mxu0 0.0
        %2213 = vmatprep.subr.mxu0 0.0
        %2214 = vmatpush2.msra.mxu0 0.0
        %2215 = vmatprep.subr.mxu0 0.0
        %2216 = vmatpush2.msra.mxu0 0.0
        %2217 = vmatprep.subr.mxu0 0.0
        %2218 = vmatpush2.msra.mxu0 0.0
        %2219 = vmatprep.subr.mxu0 0.0
        %2220 = vmatpush2.msra.mxu0 0.0
        %2221 = vmatprep.mubr.f32.mxu0 0.0
        %2222 = vmatmul.mubr.f32.gmra.mxu0 %v2155
        %v2223 = vpop.f32.mrf.mxu0
        %v2224 = vadd.f32 %v2152, %v2223
        %v2225 = vpop.f32.mrf.mxu0
        %2226 = vdwg.mxu0
        %v2227 = vmax.f32 %v2224, 0.0
        %2228 = vst [vmem:[%s755] sm:$0xff] %v2227
        %s2229 = sand.u32 %s577, 1
        %s2230 = scalar_lea.sflag [#allocation3], %s2229
        %s2231 = sand.u32 %s577, 1
        %s2232 = smul.addr %s2231, 8
        %s2233 = scalar_lea.vmem [#allocation2], %s2232
        // Predicated region
        $region121: #{resnet1d_forward.1} parent=119 // pred_check
          %p2234 = pneg %p587
        $region122: #{resnet1d_forward.1} parent=119 // pred_check_branch
          %2236 = sbr.rel (%p2234) target = $region124
        $region123: #{resnet1d_forward.1} parent=119 // pred_region
          %s2238 = ssub.s32 128, 128
          %2239 = vsyncadd %s2230, %s2238
          %s2240 = smul.addr %s39, 128
          %s2241 = scalar_lea.hbm %s25, %s2240
          %s2243 = sshll.u32 %s2233, 4
          %s2244 = int_to_ptr.vmem [resolvable:$true] %s2243
          %2246 = dma.vmem_to_hbm [thread:$0]  %s2244, 128, %s2241, %s2230
        $region124: #{resnet1d_forward.1} parent=119 // pred_fallthru
          _
      $region120: #{resnet1d_forward.1} parent=5 // pred_fallthru
        _
      %p2247 = scmp.le.s32.totalorder 2, %s34
      // Predicated region
      $region125: #{resnet1d_forward.1} parent=5 // pred_check
        %p2248 = pneg %p2247
      $region126: #{resnet1d_forward.1} parent=5 // pred_check_branch
        %2250 = sbr.rel (%p2248) target = $region128
      $region127: #{resnet1d_forward.1} parent=5 // pred_region
        %s2251 = ssub.s32 %s34, 2
        // Predicated region
        $region129: #{resnet1d_forward.1} parent=127 // pred_check
          %p2252 = pneg %p593
        $region130: #{resnet1d_forward.1} parent=127 // pred_check_branch
          %2254 = sbr.rel (%p2252) target = $region132
        $region131: #{resnet1d_forward.1} parent=127 // pred_region
          %s2255 = sand.u32 %s578, 1
          %s2256 = scalar_lea.sflag [#allocation3], %s2255
          %s2257 = sand.u32 %s578, 1
          %s2258 = smul.addr %s2257, 8
          %s2259 = scalar_lea.vmem [#allocation2], %s2258
          %2260 = dma.done %s2256, 128
        $region132: #{resnet1d_forward.1} parent=127 // pred_fallthru
          _
      $region128: #{resnet1d_forward.1} parent=5 // pred_fallthru
        _
    $region6: #{resnet1d_forward.1} parent=1 // loop_footer
      %s38 = sadd.s32 1, %s34
    $region7: #{resnet1d_forward.1} parent=1 // loop_footer_branch
      %33 = sbr.rel target = $region3
    $region8: #{resnet1d_forward.1} parent=1 // loop_exit
      _
    %2261 = vsyncpa [#allocation3], 1
    %s2262 = scalar_lea.sflag [#allocation3], 1
    %2263 = vsyncpa %s2262, 1

</llo_original>
